<compile_context>
chip_gen: v7x
topology: tpu7x:2x2x1
jax: 0.10.0
libtpu: 0.0.40
codegen_flags: <defaults>
</compile_context>

<pallas_src>
import functools

import jax
import jax.numpy as jnp
from jax import lax
from jax.experimental import pallas as pl
from jax.experimental.pallas import tpu as pltpu


# ----------------------------- shared math ---------------------------------
def _layernorm(x, g, b, eps=1e-5):
    mean = jnp.mean(x, axis=-1, keepdims=True)
    var = jnp.mean((x - mean) ** 2, axis=-1, keepdims=True)
    return (x - mean) * lax.rsqrt(var + eps) * g + b


def _gelu_exact(x):
    # matches torch.nn.GELU() (erf-based, approximate='none')
    return 0.5 * x * (1.0 + lax.erf(x * (1.0 / jnp.sqrt(2.0))))


_BF16 = jnp.bfloat16


# ----------------------------- Pallas kernel --------------------------------
def transformer_stack_kernel(
    # scalar prefetch (SMEM)
    mixw_ref,                                   # (depth,) f32: sigmoid(mix logits)
    # inputs
    ins_ref,                                    # (BB, N, D) f32  -- original input (skip source)
    ln1g_ref, ln1b_ref,                         # (1, 1, D) f32
    wqkv_ref,                                   # (1, D, 3*inner) bf16
    wout_ref,                                   # (1, inner, D) bf16
    bout_ref,                                   # (1, 1, D) f32
    ln2g_ref, ln2b_ref,                         # (1, 1, D) f32
    w1_ref, b1_ref,                             # (1, D, mlp) bf16 / (1, 1, mlp) f32
    w2_ref, b2_ref,                             # (1, mlp, D) bf16 / (1, 1, D) f32
    normg_ref, normb_ref,                       # (1, D) f32 (final norm)
    # outputs
    o_ref,                                      # (BB, N, D) f32
    # scratch
    carry_ref,                                  # VMEM (BB*N, D) f32 -- resident activations
    *, heads, dim_head,
):
    l = pl.program_id(1)
    depth = pl.num_programs(1)
    BB, N, D = ins_ref.shape
    R = BB * N
    inner = heads * dim_head
    scale = dim_head ** -0.5

    ins = ins_ref[...].reshape(R, D)            # leading-dim merge: free

    # ---- skip-mixing with the original input (PyTorch semantics) ----
    @pl.when(l == 0)
    def _():
        carry_ref[...] = ins                     # count == 0: x = insert

    @pl.when(l > 0)
    def _():
        w = mixw_ref[l]                          # SMEM scalar read
        carry_ref[...] = w * ins + (1.0 - w) * carry_ref[...]

    x = carry_ref[...]                           # (R, D) f32

    # ---------------- Attention ----------------
    h = _layernorm(x, ln1g_ref[0], ln1b_ref[0])
    qkv = jnp.dot(h.astype(_BF16), wqkv_ref[0],
                  preferred_element_type=jnp.float32)            # (R, 3*inner) f32
    qkv = qkv.reshape(BB, N, 3 * inner)                          # leading-dim split: free

    head_outs = []
    for hh in range(heads):                     # static lane-offset slices
        q = qkv[:, :, hh * dim_head:(hh + 1) * dim_head]
        k = qkv[:, :, inner + hh * dim_head:inner + (hh + 1) * dim_head]
        v = qkv[:, :, 2 * inner + hh * dim_head:2 * inner + (hh + 1) * dim_head]
        # batched over BB, contraction over dim_head -- no explicit transpose
        dots = jnp.einsum("bnd,bmd->bnm", q.astype(_BF16), k.astype(_BF16),
                          preferred_element_type=jnp.float32) * scale     # (BB, N, N)
        m = jnp.max(dots, axis=-1, keepdims=True)
        e = jnp.exp(dots - m)
        attn = e * pl.reciprocal(jnp.sum(e, axis=-1, keepdims=True), approx=True)
        head_outs.append(
            jnp.einsum("bnm,bmd->bnd", attn.astype(_BF16), v.astype(_BF16),
                       preferred_element_type=jnp.float32))               # (BB, N, dh)
    attn_out = jnp.concatenate(head_outs, axis=-1).reshape(R, inner)

    attn_out = jnp.dot(attn_out.astype(_BF16), wout_ref[0],
                       preferred_element_type=jnp.float32) + bout_ref[0]
    x = attn_out + x

    # ---------------- FeedForward ----------------
    h = _layernorm(x, ln2g_ref[0], ln2b_ref[0])
    h = jnp.dot(h.astype(_BF16), w1_ref[0],
                preferred_element_type=jnp.float32) + b1_ref[0]
    h = _gelu_exact(h)
    h = jnp.dot(h.astype(_BF16), w2_ref[0],
                preferred_element_type=jnp.float32) + b2_ref[0]
    x = h + x

    carry_ref[...] = x                            # activations stay resident in VMEM

    # ---- fused final LayerNorm, written once at the last layer ----
    @pl.when(l == depth - 1)
    def _():
        y = _layernorm(x, normg_ref[...], normb_ref[...])
        o_ref[...] = y.reshape(BB, N, D).astype(o_ref.dtype)


# ----------------------------- wrapper ---------------------------------------
def run_transformer_pallas(x, params, *, depth, heads, dim_head, mlp_dim,
                           batch_block=None):
    B, N, D = x.shape
    inner = heads * dim_head
    if batch_block is None:
        batch_block = B          # single lane/row-dense block; on v7x with large B,
                                 # use batch_block = B // 2 to feed both TensorCores
    assert B % batch_block == 0
    nbb = B // batch_block

    mixw = jax.nn.sigmoid(params["mix_logits"])   # sigmoid computed once, outside the kernel

    act = lambda bb, l, mw: (bb, 0, 0)            # activations: per batch block, resident over depth
    per_layer = lambda bb, l, mw: (l, 0, 0)       # stacked weights: streamed per depth step
    const2 = lambda bb, l, mw: (0, 0)             # final-norm params: resident

    kernel = functools.partial(transformer_stack_kernel,
                               heads=heads, dim_head=dim_head)

    # TODO(synk): for large N tile attention flash-style over KV blocks, and for
    # large mlp_dim/D tile the FFN matmuls along mlp_dim (extra "arbitrary" grid
    # axis) to respect v7x's 64 MiB VMEM; unnecessary at these shapes.
    grid_spec = pltpu.PrefetchScalarGridSpec(
        num_scalar_prefetch=1,
        grid=(nbb, depth),
        in_specs=[
            pl.BlockSpec((batch_block, N, D), act),       # insert (skip source)
            pl.BlockSpec((1, 1, D), per_layer),           # ln1 gamma
            pl.BlockSpec((1, 1, D), per_layer),           # ln1 beta
            pl.BlockSpec((1, D, 3 * inner), per_layer),   # Wqkv (bf16)
            pl.BlockSpec((1, inner, D), per_layer),       # Wout (bf16)
            pl.BlockSpec((1, 1, D), per_layer),           # bout
            pl.BlockSpec((1, 1, D), per_layer),           # ln2 gamma
            pl.BlockSpec((1, 1, D), per_layer),           # ln2 beta
            pl.BlockSpec((1, D, mlp_dim), per_layer),     # W1 (bf16)
            pl.BlockSpec((1, 1, mlp_dim), per_layer),     # b1
            pl.BlockSpec((1, mlp_dim, D), per_layer),     # W2 (bf16)
            pl.BlockSpec((1, 1, D), per_layer),           # b2
            pl.BlockSpec((1, D), const2),                 # final norm gamma
            pl.BlockSpec((1, D), const2),                 # final norm beta
        ],
        out_specs=pl.BlockSpec((batch_block, N, D), act),
        scratch_shapes=[pltpu.VMEM((batch_block * N, D), jnp.float32)],
    )

    return pl.pallas_call(
        kernel,
        out_shape=jax.ShapeDtypeStruct((B, N, D), jnp.float32),
        grid_spec=grid_spec,
        compiler_params=pltpu.CompilerParams(
            dimension_semantics=("parallel", "arbitrary")),
    )(mixw, x,
      params["ln1_g"], params["ln1_b"], params["wqkv"], params["wout"], params["bout"],
      params["ln2_g"], params["ln2_b"], params["w1"], params["b1"], params["w2"],
      params["b2"], params["norm_g"], params["norm_b"])


# ----------------------------- pure-JAX reference ----------------------------
def run_transformer_ref(x, params, *, depth, heads, dim_head, mlp_dim):
    B, N, D = x.shape
    inner = heads * dim_head
    bf = lambda t: t.astype(_BF16)
    insert = x
    cur = x
    mixw = jax.nn.sigmoid(params["mix_logits"])
    for l in range(depth):
        if l > 0:
            w = mixw[l]
            cur = w * insert + (1.0 - w) * cur
        else:
            cur = insert
        h = _layernorm(cur, params["ln1_g"][l], params["ln1_b"][l])
        qkv = jnp.dot(bf(h), params["wqkv"][l], preferred_element_type=jnp.float32)
        q, k, v = qkv[..., :inner], qkv[..., inner:2 * inner], qkv[..., 2 * inner:]
        split = lambda t: t.reshape(B, N, heads, dim_head).transpose(0, 2, 1, 3)
        q, k, v = split(q), split(k), split(v)
        dots = jnp.einsum("bhnd,bhmd->bhnm", bf(q), bf(k),
                          preferred_element_type=jnp.float32) * (dim_head ** -0.5)
        attn = jax.nn.softmax(dots, axis=-1)
        o = jnp.einsum("bhnm,bhmd->bhnd", bf(attn), bf(v),
                       preferred_element_type=jnp.float32)
        o = o.transpose(0, 2, 1, 3).reshape(B, N, inner)
        o = jnp.dot(bf(o), params["wout"][l],
                    preferred_element_type=jnp.float32) + params["bout"][l]
        cur = o + cur
        h = _layernorm(cur, params["ln2_g"][l], params["ln2_b"][l])
        h = jnp.dot(bf(h), params["w1"][l],
                    preferred_element_type=jnp.float32) + params["b1"][l]
        h = _gelu_exact(h)
        h = jnp.dot(bf(h), params["w2"][l],
                    preferred_element_type=jnp.float32) + params["b2"][l]
        cur = h + cur
    return _layernorm(cur, params["norm_g"], params["norm_b"])


# ----------------------------- param init ------------------------------------
def init_params(key, *, dim, depth, heads, dim_head, mlp_dim):
    inner = heads * dim_head
    k1, k2, k3, k4 = jax.random.split(key, 4)

    def w(k, shape):
        return (0.02 * jax.random.normal(k, shape, jnp.float32)).astype(_BF16)

    return dict(
        ln1_g=jnp.ones((depth, 1, dim), jnp.float32),
        ln1_b=jnp.zeros((depth, 1, dim), jnp.float32),
        wqkv=w(k1, (depth, dim, 3 * inner)),
        wout=w(k2, (depth, inner, dim)),
        bout=jnp.zeros((depth, 1, dim), jnp.float32),
        ln2_g=jnp.ones((depth, 1, dim), jnp.float32),
        ln2_b=jnp.zeros((depth, 1, dim), jnp.float32),
        w1=w(k3, (depth, dim, mlp_dim)),
        b1=jnp.zeros((depth, 1, mlp_dim), jnp.float32),
        w2=w(k4, (depth, mlp_dim, dim)),
        b2=jnp.zeros((depth, 1, dim), jnp.float32),
        mix_logits=jnp.zeros((depth,), jnp.float32),   # nn.Parameter(torch.zeros(depth))
        norm_g=jnp.ones((1, dim), jnp.float32),
        norm_b=jnp.zeros((1, dim), jnp.float32),
    )


if __name__ == "__main__":
    # small shapes consistent with the module
    B, N = 2, 8
    dim, depth, heads, dim_head, mlp_dim = 32, 2, 4, 8, 64

    key = jax.random.PRNGKey(0)
    key, kx = jax.random.split(key)
    x = jax.random.normal(kx, (B, N, dim), jnp.float32)
    params = init_params(key, dim=dim, depth=depth, heads=heads,
                         dim_head=dim_head, mlp_dim=mlp_dim)

    out = run_transformer_pallas(x, params, depth=depth, heads=heads,
                                 dim_head=dim_head, mlp_dim=mlp_dim)
    out = jax.block_until_ready(out)

    ref = run_transformer_ref(x, params, depth=depth, heads=heads,
                              dim_head=dim_head, mlp_dim=mlp_dim)
    if not jnp.allclose(out, ref, atol=1e-2, rtol=1e-2):
        err = float(jnp.max(jnp.abs(out - ref)))
        raise AssertionError(f"Pallas output mismatch vs. JAX reference (max abs err {err})")

    print("KERNEL_OK")
</pallas_src>

<mosaic_0001>
module attributes {stable_mosaic.version = 11 : i64} {
  func.func @transformer_stack_kernel(%arg0: i32, %arg1: i32, %arg2: memref<2xf32, #tpu.memory_space<smem>>, %arg3: memref<2x8x32xf32, #tpu.memory_space<vmem>>, %arg4: memref<1x1x32xf32, #tpu.memory_space<vmem>>, %arg5: memref<1x1x32xf32, #tpu.memory_space<vmem>>, %arg6: memref<1x32x96xbf16, #tpu.memory_space<vmem>>, %arg7: memref<1x32x32xbf16, #tpu.memory_space<vmem>>, %arg8: memref<1x1x32xf32, #tpu.memory_space<vmem>>, %arg9: memref<1x1x32xf32, #tpu.memory_space<vmem>>, %arg10: memref<1x1x32xf32, #tpu.memory_space<vmem>>, %arg11: memref<1x32x64xbf16, #tpu.memory_space<vmem>>, %arg12: memref<1x1x64xf32, #tpu.memory_space<vmem>>, %arg13: memref<1x64x32xbf16, #tpu.memory_space<vmem>>, %arg14: memref<1x1x32xf32, #tpu.memory_space<vmem>>, %arg15: memref<1x32xf32, #tpu.memory_space<vmem>>, %arg16: memref<1x32xf32, #tpu.memory_space<vmem>>, %arg17: memref<2x8x32xf32, #tpu.memory_space<vmem>>, %arg18: memref<16x32xf32, #tpu.memory_space<vmem>>) attributes {dimension_semantics = [#tpu.dimension_semantics<parallel>, #tpu.dimension_semantics<arbitrary>], iteration_bounds = array<i64: 1, 2>, scalar_prefetch = 1 : i64, scratch_operands = 1 : i64, tpu.core_type = #tpu.core_type<tc>, window_params = [{transform_indices = @transform_0, window_bounds = array<i64: 2, 8, 32>}, {transform_indices = @transform_1, window_bounds = array<i64: 1, 1, 32>}, {transform_indices = @transform_2, window_bounds = array<i64: 1, 1, 32>}, {transform_indices = @transform_3, window_bounds = array<i64: 1, 32, 96>}, {transform_indices = @transform_4, window_bounds = array<i64: 1, 32, 32>}, {transform_indices = @transform_5, window_bounds = array<i64: 1, 1, 32>}, {transform_indices = @transform_6, window_bounds = array<i64: 1, 1, 32>}, {transform_indices = @transform_7, window_bounds = array<i64: 1, 1, 32>}, {transform_indices = @transform_8, window_bounds = array<i64: 1, 32, 64>}, {transform_indices = @transform_9, window_bounds = array<i64: 1, 1, 64>}, {transform_indices = @transform_10, window_bounds = array<i64: 1, 64, 32>}, {transform_indices = @transform_11, window_bounds = array<i64: 1, 1, 32>}, {pipeline_mode = #tpu.pipeline_mode<synchronous>, transform_indices = @transform_12, window_bounds = array<i64: 1, 32>}, {pipeline_mode = #tpu.pipeline_mode<synchronous>, transform_indices = @transform_13, window_bounds = array<i64: 1, 32>}, {transform_indices = @transform_14, window_bounds = array<i64: 2, 8, 32>}]} {
    %c0 = arith.constant 0 : index
    %c0_0 = arith.constant 0 : index
    %c0_1 = arith.constant 0 : index
    %0 = vector.load %arg3[%c0, %c0_0, %c0_1] : memref<2x8x32xf32, #tpu.memory_space<vmem>>, vector<2x8x32xf32>
    %1 = vector.shape_cast %0 : vector<2x8x32xf32> to vector<16x32xf32>
    %c0_i32 = arith.constant 0 : i32
    %2 = arith.cmpi eq, %arg1, %c0_i32 : i32
    %3 = arith.extui %2 : i1 to i32
    %c0_i32_2 = arith.constant 0 : i32
    %4 = arith.cmpi ne, %3, %c0_i32_2 : i32
    scf.if %4 {
      %c0_80 = arith.constant 0 : index
      %c0_81 = arith.constant 0 : index
      %192 = vector.load %arg18[%c0_80, %c0_81] : memref<16x32xf32, #tpu.memory_space<vmem>>, vector<16x32xf32>
      tpu.vector_store %arg18[%c0_80, %c0_81], %1 {strides = array<i32>} : memref<16x32xf32, #tpu.memory_space<vmem>>, vector<16x32xf32>,
    } else {
    }
    %c0_i32_3 = arith.constant 0 : i32
    %5 = arith.cmpi sgt, %arg1, %c0_i32_3 : i32
    %6 = arith.extui %5 : i1 to i32
    %c0_i32_4 = arith.constant 0 : i32
    %7 = arith.cmpi ne, %6, %c0_i32_4 : i32
    scf.if %7 {
      %192 = arith.index_cast %arg1 : i32 to index
      %193 = memref.load %arg2[%192] : memref<2xf32, #tpu.memory_space<smem>>
      %194 = vector.broadcast %193 : f32 to vector<16x32xf32>
      %195 = arith.mulf %194, %1 : vector<16x32xf32>
      %cst_80 = arith.constant 1.000000e+00 : f32
      %196 = arith.subf %cst_80, %193 : f32
      %c0_81 = arith.constant 0 : index
      %c0_82 = arith.constant 0 : index
      %197 = vector.load %arg18[%c0_81, %c0_82] : memref<16x32xf32, #tpu.memory_space<vmem>>, vector<16x32xf32>
      %198 = vector.broadcast %196 : f32 to vector<16x32xf32>
      %199 = arith.mulf %198, %197 : vector<16x32xf32>
      %200 = arith.addf %195, %199 : vector<16x32xf32>
      %c0_83 = arith.constant 0 : index
      %c0_84 = arith.constant 0 : index
      %201 = vector.load %arg18[%c0_83, %c0_84] : memref<16x32xf32, #tpu.memory_space<vmem>>, vector<16x32xf32>
      tpu.vector_store %arg18[%c0_83, %c0_84], %200 {strides = array<i32>} : memref<16x32xf32, #tpu.memory_space<vmem>>, vector<16x32xf32>,
    } else {
    }
    %c0_5 = arith.constant 0 : index
    %c0_6 = arith.constant 0 : index
    %8 = vector.load %arg18[%c0_5, %c0_6] : memref<16x32xf32, #tpu.memory_space<vmem>>, vector<16x32xf32>
    %c0_7 = arith.constant 0 : index
    %c0_8 = arith.constant 0 : index
    %c0_9 = arith.constant 0 : index
    %9 = vector.load %arg4[%c0_7, %c0_8, %c0_9] : memref<1x1x32xf32, #tpu.memory_space<vmem>>, vector<1x1x32xf32>
    %10 = vector.shape_cast %9 : vector<1x1x32xf32> to vector<1x32xf32>
    %c0_10 = arith.constant 0 : index
    %c0_11 = arith.constant 0 : index
    %c0_12 = arith.constant 0 : index
    %11 = vector.load %arg5[%c0_10, %c0_11, %c0_12] : memref<1x1x32xf32, #tpu.memory_space<vmem>>, vector<1x1x32xf32>
    %12 = vector.shape_cast %11 : vector<1x1x32xf32> to vector<1x32xf32>
    %cst = arith.constant dense<0.000000e+00> : vector<16xf32>
    %13 = vector.multi_reduction <add>, %8, %cst [1] : vector<16x32xf32> to vector<16xf32>
    %14 = vector.shape_cast %13 : vector<16xf32> to vector<16x1xf32>
    %cst_13 = arith.constant 3.200000e+01 : f32
    %15 = vector.broadcast %cst_13 : f32 to vector<16x1xf32>
    %16 = arith.divf %14, %15 : vector<16x1xf32>
    %17 = vector.broadcast %16 : vector<16x1xf32> to vector<16x32xf32>
    %18 = arith.subf %8, %17 : vector<16x32xf32>
    %19 = arith.mulf %18, %18 : vector<16x32xf32>
    %cst_14 = arith.constant dense<0.000000e+00> : vector<16xf32>
    %20 = vector.multi_reduction <add>, %19, %cst_14 [1] : vector<16x32xf32> to vector<16xf32>
    %21 = vector.shape_cast %20 : vector<16xf32> to vector<16x1xf32>
    %cst_15 = arith.constant 3.200000e+01 : f32
    %22 = vector.broadcast %cst_15 : f32 to vector<16x1xf32>
    %23 = arith.divf %21, %22 : vector<16x1xf32>
    %24 = vector.broadcast %16 : vector<16x1xf32> to vector<16x32xf32>
    %25 = arith.subf %8, %24 : vector<16x32xf32>
    %cst_16 = arith.constant 9.99999974E-6 : f32
    %26 = vector.broadcast %cst_16 : f32 to vector<16x1xf32>
    %27 = arith.addf %23, %26 : vector<16x1xf32>
    %28 = math.rsqrt %27 : vector<16x1xf32>
    %29 = vector.broadcast %28 : vector<16x1xf32> to vector<16x32xf32>
    %30 = arith.mulf %25, %29 : vector<16x32xf32>
    %31 = vector.broadcast %10 : vector<1x32xf32> to vector<16x32xf32>
    %32 = arith.mulf %30, %31 : vector<16x32xf32>
    %33 = vector.broadcast %12 : vector<1x32xf32> to vector<16x32xf32>
    %34 = arith.addf %32, %33 : vector<16x32xf32>
    %35 = arith.truncf %34 : vector<16x32xf32> to vector<16x32xbf16>
    %c0_17 = arith.constant 0 : index
    %c0_18 = arith.constant 0 : index
    %c0_19 = arith.constant 0 : index
    %36 = vector.load %arg6[%c0_17, %c0_18, %c0_19] : memref<1x32x96xbf16, #tpu.memory_space<vmem>>, vector<1x32x96xbf16>
    %37 = vector.shape_cast %36 : vector<1x32x96xbf16> to vector<32x96xbf16>
    %cst_20 = arith.constant dense<0.000000e+00> : vector<16x96xf32>
    %38 = tpu.matmul %35, %37, %cst_20 {dimension_numbers = #tpu.dot_dimension_numbers<[1], [0], [0], [1], [0, 0, 1, 1], [], []>} : vector<16x32xbf16>, vector<32x96xbf16>, vector<16x96xf32> -> vector<16x96xf32>
    %39 = vector.shape_cast %38 : vector<16x96xf32> to vector<2x8x96xf32>
    %40 = vector.extract_strided_slice %39 {offsets = [0, 0, 0], sizes = [2, 8, 8], strides = [1, 1, 1]} : vector<2x8x96xf32> to vector<2x8x8xf32>
    %41 = vector.extract_strided_slice %39 {offsets = [0, 0, 32], sizes = [2, 8, 8], strides = [1, 1, 1]} : vector<2x8x96xf32> to vector<2x8x8xf32>
    %42 = vector.extract_strided_slice %39 {offsets = [0, 0, 64], sizes = [2, 8, 8], strides = [1, 1, 1]} : vector<2x8x96xf32> to vector<2x8x8xf32>
    %43 = arith.truncf %40 : vector<2x8x8xf32> to vector<2x8x8xbf16>
    %44 = arith.truncf %41 : vector<2x8x8xf32> to vector<2x8x8xbf16>
    "tpu.trace_start"() <{level = 10 : i32, message = "bnd,bmd->bnm"}> : () -> ()
    %cst_21 = arith.constant dense<0.000000e+00> : vector<2x8x8xf32>
    %45 = tpu.matmul %43, %44, %cst_21 {dimension_numbers = #tpu.dot_dimension_numbers<[2], [2], [1], [1], [0, 0, 0, 1, 1, 1], [0], [0]>} : vector<2x8x8xbf16>, vector<2x8x8xbf16>, vector<2x8x8xf32> -> vector<2x8x8xf32>
    "tpu.trace_stop"() : () -> ()
    %cst_22 = arith.constant 0.353553385 : f32
    %46 = vector.broadcast %cst_22 : f32 to vector<2x8x8xf32>
    %47 = arith.mulf %45, %46 : vector<2x8x8xf32>
    %cst_23 = arith.constant dense<0xFF800000> : vector<2x8xf32>
    %48 = vector.multi_reduction <maximumf>, %47, %cst_23 [2] : vector<2x8x8xf32> to vector<2x8xf32>
    %49 = vector.shape_cast %48 : vector<2x8xf32> to vector<2x8x1xf32>
    %50 = vector.broadcast %49 : vector<2x8x1xf32> to vector<2x8x8xf32>
    %51 = arith.subf %47, %50 : vector<2x8x8xf32>
    %52 = math.exp %51 : vector<2x8x8xf32>
    %cst_24 = arith.constant dense<0.000000e+00> : vector<2x8xf32>
    %53 = vector.multi_reduction <add>, %52, %cst_24 [2] : vector<2x8x8xf32> to vector<2x8xf32>
    %54 = vector.shape_cast %53 : vector<2x8xf32> to vector<2x8x1xf32>
    %55 = tpu.reciprocal %54 {approx = true} : vector<2x8x1xf32> -> vector<2x8x1xf32>
    %56 = vector.broadcast %55 : vector<2x8x1xf32> to vector<2x8x8xf32>
    %57 = arith.mulf %52, %56 : vector<2x8x8xf32>
    %58 = arith.truncf %57 : vector<2x8x8xf32> to vector<2x8x8xbf16>
    %59 = arith.truncf %42 : vector<2x8x8xf32> to vector<2x8x8xbf16>
    "tpu.trace_start"() <{level = 10 : i32, message = "bnm,bmd->bnd"}> : () -> ()
    %cst_25 = arith.constant dense<0.000000e+00> : vector<2x8x8xf32>
    %60 = tpu.matmul %58, %59, %cst_25 {dimension_numbers = #tpu.dot_dimension_numbers<[2], [1], [1], [2], [0, 0, 0, 1, 1, 2], [0], [0]>} : vector<2x8x8xbf16>, vector<2x8x8xbf16>, vector<2x8x8xf32> -> vector<2x8x8xf32>
    "tpu.trace_stop"() : () -> ()
    %61 = vector.extract_strided_slice %39 {offsets = [0, 0, 8], sizes = [2, 8, 8], strides = [1, 1, 1]} : vector<2x8x96xf32> to vector<2x8x8xf32>
    %62 = vector.extract_strided_slice %39 {offsets = [0, 0, 40], sizes = [2, 8, 8], strides = [1, 1, 1]} : vector<2x8x96xf32> to vector<2x8x8xf32>
    %63 = vector.extract_strided_slice %39 {offsets = [0, 0, 72], sizes = [2, 8, 8], strides = [1, 1, 1]} : vector<2x8x96xf32> to vector<2x8x8xf32>
    %64 = arith.truncf %61 : vector<2x8x8xf32> to vector<2x8x8xbf16>
    %65 = arith.truncf %62 : vector<2x8x8xf32> to vector<2x8x8xbf16>
    "tpu.trace_start"() <{level = 10 : i32, message = "bnd,bmd->bnm"}> : () -> ()
    %cst_26 = arith.constant dense<0.000000e+00> : vector<2x8x8xf32>
    %66 = tpu.matmul %64, %65, %cst_26 {dimension_numbers = #tpu.dot_dimension_numbers<[2], [2], [1], [1], [0, 0, 0, 1, 1, 1], [0], [0]>} : vector<2x8x8xbf16>, vector<2x8x8xbf16>, vector<2x8x8xf32> -> vector<2x8x8xf32>
    "tpu.trace_stop"() : () -> ()
    %cst_27 = arith.constant 0.353553385 : f32
    %67 = vector.broadcast %cst_27 : f32 to vector<2x8x8xf32>
    %68 = arith.mulf %66, %67 : vector<2x8x8xf32>
    %cst_28 = arith.constant dense<0xFF800000> : vector<2x8xf32>
    %69 = vector.multi_reduction <maximumf>, %68, %cst_28 [2] : vector<2x8x8xf32> to vector<2x8xf32>
    %70 = vector.shape_cast %69 : vector<2x8xf32> to vector<2x8x1xf32>
    %71 = vector.broadcast %70 : vector<2x8x1xf32> to vector<2x8x8xf32>
    %72 = arith.subf %68, %71 : vector<2x8x8xf32>
    %73 = math.exp %72 : vector<2x8x8xf32>
    %cst_29 = arith.constant dense<0.000000e+00> : vector<2x8xf32>
    %74 = vector.multi_reduction <add>, %73, %cst_29 [2] : vector<2x8x8xf32> to vector<2x8xf32>
    %75 = vector.shape_cast %74 : vector<2x8xf32> to vector<2x8x1xf32>
    %76 = tpu.reciprocal %75 {approx = true} : vector<2x8x1xf32> -> vector<2x8x1xf32>
    %77 = vector.broadcast %76 : vector<2x8x1xf32> to vector<2x8x8xf32>
    %78 = arith.mulf %73, %77 : vector<2x8x8xf32>
    %79 = arith.truncf %78 : vector<2x8x8xf32> to vector<2x8x8xbf16>
    %80 = arith.truncf %63 : vector<2x8x8xf32> to vector<2x8x8xbf16>
    "tpu.trace_start"() <{level = 10 : i32, message = "bnm,bmd->bnd"}> : () -> ()
    %cst_30 = arith.constant dense<0.000000e+00> : vector<2x8x8xf32>
    %81 = tpu.matmul %79, %80, %cst_30 {dimension_numbers = #tpu.dot_dimension_numbers<[2], [1], [1], [2], [0, 0, 0, 1, 1, 2], [0], [0]>} : vector<2x8x8xbf16>, vector<2x8x8xbf16>, vector<2x8x8xf32> -> vector<2x8x8xf32>
    "tpu.trace_stop"() : () -> ()
    %82 = vector.extract_strided_slice %39 {offsets = [0, 0, 16], sizes = [2, 8, 8], strides = [1, 1, 1]} : vector<2x8x96xf32> to vector<2x8x8xf32>
    %83 = vector.extract_strided_slice %39 {offsets = [0, 0, 48], sizes = [2, 8, 8], strides = [1, 1, 1]} : vector<2x8x96xf32> to vector<2x8x8xf32>
    %84 = vector.extract_strided_slice %39 {offsets = [0, 0, 80], sizes = [2, 8, 8], strides = [1, 1, 1]} : vector<2x8x96xf32> to vector<2x8x8xf32>
    %85 = arith.truncf %82 : vector<2x8x8xf32> to vector<2x8x8xbf16>
    %86 = arith.truncf %83 : vector<2x8x8xf32> to vector<2x8x8xbf16>
    "tpu.trace_start"() <{level = 10 : i32, message = "bnd,bmd->bnm"}> : () -> ()
    %cst_31 = arith.constant dense<0.000000e+00> : vector<2x8x8xf32>
    %87 = tpu.matmul %85, %86, %cst_31 {dimension_numbers = #tpu.dot_dimension_numbers<[2], [2], [1], [1], [0, 0, 0, 1, 1, 1], [0], [0]>} : vector<2x8x8xbf16>, vector<2x8x8xbf16>, vector<2x8x8xf32> -> vector<2x8x8xf32>
    "tpu.trace_stop"() : () -> ()
    %cst_32 = arith.constant 0.353553385 : f32
    %88 = vector.broadcast %cst_32 : f32 to vector<2x8x8xf32>
    %89 = arith.mulf %87, %88 : vector<2x8x8xf32>
    %cst_33 = arith.constant dense<0xFF800000> : vector<2x8xf32>
    %90 = vector.multi_reduction <maximumf>, %89, %cst_33 [2] : vector<2x8x8xf32> to vector<2x8xf32>
    %91 = vector.shape_cast %90 : vector<2x8xf32> to vector<2x8x1xf32>
    %92 = vector.broadcast %91 : vector<2x8x1xf32> to vector<2x8x8xf32>
    %93 = arith.subf %89, %92 : vector<2x8x8xf32>
    %94 = math.exp %93 : vector<2x8x8xf32>
    %cst_34 = arith.constant dense<0.000000e+00> : vector<2x8xf32>
    %95 = vector.multi_reduction <add>, %94, %cst_34 [2] : vector<2x8x8xf32> to vector<2x8xf32>
    %96 = vector.shape_cast %95 : vector<2x8xf32> to vector<2x8x1xf32>
    %97 = tpu.reciprocal %96 {approx = true} : vector<2x8x1xf32> -> vector<2x8x1xf32>
    %98 = vector.broadcast %97 : vector<2x8x1xf32> to vector<2x8x8xf32>
    %99 = arith.mulf %94, %98 : vector<2x8x8xf32>
    %100 = arith.truncf %99 : vector<2x8x8xf32> to vector<2x8x8xbf16>
    %101 = arith.truncf %84 : vector<2x8x8xf32> to vector<2x8x8xbf16>
    "tpu.trace_start"() <{level = 10 : i32, message = "bnm,bmd->bnd"}> : () -> ()
    %cst_35 = arith.constant dense<0.000000e+00> : vector<2x8x8xf32>
    %102 = tpu.matmul %100, %101, %cst_35 {dimension_numbers = #tpu.dot_dimension_numbers<[2], [1], [1], [2], [0, 0, 0, 1, 1, 2], [0], [0]>} : vector<2x8x8xbf16>, vector<2x8x8xbf16>, vector<2x8x8xf32> -> vector<2x8x8xf32>
    "tpu.trace_stop"() : () -> ()
    %103 = vector.extract_strided_slice %39 {offsets = [0, 0, 24], sizes = [2, 8, 8], strides = [1, 1, 1]} : vector<2x8x96xf32> to vector<2x8x8xf32>
    %104 = vector.extract_strided_slice %39 {offsets = [0, 0, 56], sizes = [2, 8, 8], strides = [1, 1, 1]} : vector<2x8x96xf32> to vector<2x8x8xf32>
    %105 = vector.extract_strided_slice %39 {offsets = [0, 0, 88], sizes = [2, 8, 8], strides = [1, 1, 1]} : vector<2x8x96xf32> to vector<2x8x8xf32>
    %106 = arith.truncf %103 : vector<2x8x8xf32> to vector<2x8x8xbf16>
    %107 = arith.truncf %104 : vector<2x8x8xf32> to vector<2x8x8xbf16>
    "tpu.trace_start"() <{level = 10 : i32, message = "bnd,bmd->bnm"}> : () -> ()
    %cst_36 = arith.constant dense<0.000000e+00> : vector<2x8x8xf32>
    %108 = tpu.matmul %106, %107, %cst_36 {dimension_numbers = #tpu.dot_dimension_numbers<[2], [2], [1], [1], [0, 0, 0, 1, 1, 1], [0], [0]>} : vector<2x8x8xbf16>, vector<2x8x8xbf16>, vector<2x8x8xf32> -> vector<2x8x8xf32>
    "tpu.trace_stop"() : () -> ()
    %cst_37 = arith.constant 0.353553385 : f32
    %109 = vector.broadcast %cst_37 : f32 to vector<2x8x8xf32>
    %110 = arith.mulf %108, %109 : vector<2x8x8xf32>
    %cst_38 = arith.constant dense<0xFF800000> : vector<2x8xf32>
    %111 = vector.multi_reduction <maximumf>, %110, %cst_38 [2] : vector<2x8x8xf32> to vector<2x8xf32>
    %112 = vector.shape_cast %111 : vector<2x8xf32> to vector<2x8x1xf32>
    %113 = vector.broadcast %112 : vector<2x8x1xf32> to vector<2x8x8xf32>
    %114 = arith.subf %110, %113 : vector<2x8x8xf32>
    %115 = math.exp %114 : vector<2x8x8xf32>
    %cst_39 = arith.constant dense<0.000000e+00> : vector<2x8xf32>
    %116 = vector.multi_reduction <add>, %115, %cst_39 [2] : vector<2x8x8xf32> to vector<2x8xf32>
    %117 = vector.shape_cast %116 : vector<2x8xf32> to vector<2x8x1xf32>
    %118 = tpu.reciprocal %117 {approx = true} : vector<2x8x1xf32> -> vector<2x8x1xf32>
    %119 = vector.broadcast %118 : vector<2x8x1xf32> to vector<2x8x8xf32>
    %120 = arith.mulf %115, %119 : vector<2x8x8xf32>
    %121 = arith.truncf %120 : vector<2x8x8xf32> to vector<2x8x8xbf16>
    %122 = arith.truncf %105 : vector<2x8x8xf32> to vector<2x8x8xbf16>
    "tpu.trace_start"() <{level = 10 : i32, message = "bnm,bmd->bnd"}> : () -> ()
    %cst_40 = arith.constant dense<0.000000e+00> : vector<2x8x8xf32>
    %123 = tpu.matmul %121, %122, %cst_40 {dimension_numbers = #tpu.dot_dimension_numbers<[2], [1], [1], [2], [0, 0, 0, 1, 1, 2], [0], [0]>} : vector<2x8x8xbf16>, vector<2x8x8xbf16>, vector<2x8x8xf32> -> vector<2x8x8xf32>
    "tpu.trace_stop"() : () -> ()
    %124 = tpu.concatenate %60, %81, %102, %123 in 2 : vector<2x8x8xf32>, vector<2x8x8xf32>, vector<2x8x8xf32>, vector<2x8x8xf32> -> vector<2x8x32xf32>
    %125 = vector.shape_cast %124 : vector<2x8x32xf32> to vector<16x32xf32>
    %126 = arith.truncf %125 : vector<16x32xf32> to vector<16x32xbf16>
    %c0_41 = arith.constant 0 : index
    %c0_42 = arith.constant 0 : index
    %c0_43 = arith.constant 0 : index
    %127 = vector.load %arg7[%c0_41, %c0_42, %c0_43] : memref<1x32x32xbf16, #tpu.memory_space<vmem>>, vector<1x32x32xbf16>
    %128 = vector.shape_cast %127 : vector<1x32x32xbf16> to vector<32x32xbf16>
    %cst_44 = arith.constant dense<0.000000e+00> : vector<16x32xf32>
    %129 = tpu.matmul %126, %128, %cst_44 {dimension_numbers = #tpu.dot_dimension_numbers<[1], [0], [0], [1], [0, 0, 1, 1], [], []>} : vector<16x32xbf16>, vector<32x32xbf16>, vector<16x32xf32> -> vector<16x32xf32>
    %c0_45 = arith.constant 0 : index
    %c0_46 = arith.constant 0 : index
    %c0_47 = arith.constant 0 : index
    %130 = vector.load %arg8[%c0_45, %c0_46, %c0_47] : memref<1x1x32xf32, #tpu.memory_space<vmem>>, vector<1x1x32xf32>
    %131 = vector.shape_cast %130 : vector<1x1x32xf32> to vector<1x32xf32>
    %132 = vector.broadcast %131 : vector<1x32xf32> to vector<16x32xf32>
    %133 = arith.addf %129, %132 : vector<16x32xf32>
    %134 = arith.addf %133, %8 : vector<16x32xf32>
    %c0_48 = arith.constant 0 : index
    %c0_49 = arith.constant 0 : index
    %c0_50 = arith.constant 0 : index
    %135 = vector.load %arg9[%c0_48, %c0_49, %c0_50] : memref<1x1x32xf32, #tpu.memory_space<vmem>>, vector<1x1x32xf32>
    %136 = vector.shape_cast %135 : vector<1x1x32xf32> to vector<1x32xf32>
    %c0_51 = arith.constant 0 : index
    %c0_52 = arith.constant 0 : index
    %c0_53 = arith.constant 0 : index
    %137 = vector.load %arg10[%c0_51, %c0_52, %c0_53] : memref<1x1x32xf32, #tpu.memory_space<vmem>>, vector<1x1x32xf32>
    %138 = vector.shape_cast %137 : vector<1x1x32xf32> to vector<1x32xf32>
    %cst_54 = arith.constant dense<0.000000e+00> : vector<16xf32>
    %139 = vector.multi_reduction <add>, %134, %cst_54 [1] : vector<16x32xf32> to vector<16xf32>
    %140 = vector.shape_cast %139 : vector<16xf32> to vector<16x1xf32>
    %cst_55 = arith.constant 3.200000e+01 : f32
    %141 = vector.broadcast %cst_55 : f32 to vector<16x1xf32>
    %142 = arith.divf %140, %141 : vector<16x1xf32>
    %143 = vector.broadcast %142 : vector<16x1xf32> to vector<16x32xf32>
    %144 = arith.subf %134, %143 : vector<16x32xf32>
    %145 = arith.mulf %144, %144 : vector<16x32xf32>
    %cst_56 = arith.constant dense<0.000000e+00> : vector<16xf32>
    %146 = vector.multi_reduction <add>, %145, %cst_56 [1] : vector<16x32xf32> to vector<16xf32>
    %147 = vector.shape_cast %146 : vector<16xf32> to vector<16x1xf32>
    %cst_57 = arith.constant 3.200000e+01 : f32
    %148 = vector.broadcast %cst_57 : f32 to vector<16x1xf32>
    %149 = arith.divf %147, %148 : vector<16x1xf32>
    %150 = vector.broadcast %142 : vector<16x1xf32> to vector<16x32xf32>
    %151 = arith.subf %134, %150 : vector<16x32xf32>
    %cst_58 = arith.constant 9.99999974E-6 : f32
    %152 = vector.broadcast %cst_58 : f32 to vector<16x1xf32>
    %153 = arith.addf %149, %152 : vector<16x1xf32>
    %154 = math.rsqrt %153 : vector<16x1xf32>
    %155 = vector.broadcast %154 : vector<16x1xf32> to vector<16x32xf32>
    %156 = arith.mulf %151, %155 : vector<16x32xf32>
    %157 = vector.broadcast %136 : vector<1x32xf32> to vector<16x32xf32>
    %158 = arith.mulf %156, %157 : vector<16x32xf32>
    %159 = vector.broadcast %138 : vector<1x32xf32> to vector<16x32xf32>
    %160 = arith.addf %158, %159 : vector<16x32xf32>
    %161 = arith.truncf %160 : vector<16x32xf32> to vector<16x32xbf16>
    %c0_59 = arith.constant 0 : index
    %c0_60 = arith.constant 0 : index
    %c0_61 = arith.constant 0 : index
    %162 = vector.load %arg11[%c0_59, %c0_60, %c0_61] : memref<1x32x64xbf16, #tpu.memory_space<vmem>>, vector<1x32x64xbf16>
    %163 = vector.shape_cast %162 : vector<1x32x64xbf16> to vector<32x64xbf16>
    %cst_62 = arith.constant dense<0.000000e+00> : vector<16x64xf32>
    %164 = tpu.matmul %161, %163, %cst_62 {dimension_numbers = #tpu.dot_dimension_numbers<[1], [0], [0], [1], [0, 0, 1, 1], [], []>} : vector<16x32xbf16>, vector<32x64xbf16>, vector<16x64xf32> -> vector<16x64xf32>
    %c0_63 = arith.constant 0 : index
    %c0_64 = arith.constant 0 : index
    %c0_65 = arith.constant 0 : index
    %165 = vector.load %arg12[%c0_63, %c0_64, %c0_65] : memref<1x1x64xf32, #tpu.memory_space<vmem>>, vector<1x1x64xf32>
    %166 = vector.shape_cast %165 : vector<1x1x64xf32> to vector<1x64xf32>
    %167 = vector.broadcast %166 : vector<1x64xf32> to vector<16x64xf32>
    %168 = arith.addf %164, %167 : vector<16x64xf32>
    %cst_66 = arith.constant 5.000000e-01 : f32
    %169 = vector.broadcast %cst_66 : f32 to vector<16x64xf32>
    %170 = arith.mulf %169, %168 : vector<16x64xf32>
    %cst_67 = arith.constant 2.000000e+00 : f32
    %171 = math.sqrt %cst_67 : f32
    %cst_68 = arith.constant 1.000000e+00 : f32
    %172 = arith.divf %cst_68, %171 : f32
    %173 = vector.broadcast %172 : f32 to vector<16x64xf32>
    %174 = arith.mulf %168, %173 : vector<16x64xf32>
    %175 = math.erf %174 : vector<16x64xf32>
    %cst_69 = arith.constant 1.000000e+00 : f32
    %176 = vector.broadcast %cst_69 : f32 to vector<16x64xf32>
    %177 = arith.addf %176, %175 : vector<16x64xf32>
    %178 = arith.mulf %170, %177 : vector<16x64xf32>
    %179 = arith.truncf %178 : vector<16x64xf32> to vector<16x64xbf16>
    %c0_70 = arith.constant 0 : index
    %c0_71 = arith.constant 0 : index
    %c0_72 = arith.constant 0 : index
    %180 = vector.load %arg13[%c0_70, %c0_71, %c0_72] : memref<1x64x32xbf16, #tpu.memory_space<vmem>>, vector<1x64x32xbf16>
    %181 = vector.shape_cast %180 : vector<1x64x32xbf16> to vector<64x32xbf16>
    %cst_73 = arith.constant dense<0.000000e+00> : vector<16x32xf32>
    %182 = tpu.matmul %179, %181, %cst_73 {dimension_numbers = #tpu.dot_dimension_numbers<[1], [0], [0], [1], [0, 0, 1, 1], [], []>} : vector<16x64xbf16>, vector<64x32xbf16>, vector<16x32xf32> -> vector<16x32xf32>
    %c0_74 = arith.constant 0 : index
    %c0_75 = arith.constant 0 : index
    %c0_76 = arith.constant 0 : index
    %183 = vector.load %arg14[%c0_74, %c0_75, %c0_76] : memref<1x1x32xf32, #tpu.memory_space<vmem>>, vector<1x1x32xf32>
    %184 = vector.shape_cast %183 : vector<1x1x32xf32> to vector<1x32xf32>
    %185 = vector.broadcast %184 : vector<1x32xf32> to vector<16x32xf32>
    %186 = arith.addf %182, %185 : vector<16x32xf32>
    %187 = arith.addf %186, %134 : vector<16x32xf32>
    %c0_77 = arith.constant 0 : index
    %c0_78 = arith.constant 0 : index
    %188 = vector.load %arg18[%c0_77, %c0_78] : memref<16x32xf32, #tpu.memory_space<vmem>>, vector<16x32xf32>
    tpu.vector_store %arg18[%c0_77, %c0_78], %187 {strides = array<i32>} : memref<16x32xf32, #tpu.memory_space<vmem>>, vector<16x32xf32>,
    %c1_i32 = arith.constant 1 : i32
    %189 = arith.cmpi eq, %arg1, %c1_i32 : i32
    %190 = arith.extui %189 : i1 to i32
    %c0_i32_79 = arith.constant 0 : i32
    %191 = arith.cmpi ne, %190, %c0_i32_79 : i32
    scf.if %191 {
      %c0_80 = arith.constant 0 : index
      %c0_81 = arith.constant 0 : index
      %192 = vector.load %arg15[%c0_80, %c0_81] : memref<1x32xf32, #tpu.memory_space<vmem>>, vector<1x32xf32>
      %c0_82 = arith.constant 0 : index
      %c0_83 = arith.constant 0 : index
      %193 = vector.load %arg16[%c0_82, %c0_83] : memref<1x32xf32, #tpu.memory_space<vmem>>, vector<1x32xf32>
      %cst_84 = arith.constant dense<0.000000e+00> : vector<16xf32>
      %194 = vector.multi_reduction <add>, %187, %cst_84 [1] : vector<16x32xf32> to vector<16xf32>
      %195 = vector.shape_cast %194 : vector<16xf32> to vector<16x1xf32>
      %cst_85 = arith.constant 3.200000e+01 : f32
      %196 = vector.broadcast %cst_85 : f32 to vector<16x1xf32>
      %197 = arith.divf %195, %196 : vector<16x1xf32>
      %198 = vector.broadcast %197 : vector<16x1xf32> to vector<16x32xf32>
      %199 = arith.subf %187, %198 : vector<16x32xf32>
      %200 = arith.mulf %199, %199 : vector<16x32xf32>
      %cst_86 = arith.constant dense<0.000000e+00> : vector<16xf32>
      %201 = vector.multi_reduction <add>, %200, %cst_86 [1] : vector<16x32xf32> to vector<16xf32>
      %202 = vector.shape_cast %201 : vector<16xf32> to vector<16x1xf32>
      %cst_87 = arith.constant 3.200000e+01 : f32
      %203 = vector.broadcast %cst_87 : f32 to vector<16x1xf32>
      %204 = arith.divf %202, %203 : vector<16x1xf32>
      %205 = vector.broadcast %197 : vector<16x1xf32> to vector<16x32xf32>
      %206 = arith.subf %187, %205 : vector<16x32xf32>
      %cst_88 = arith.constant 9.99999974E-6 : f32
      %207 = vector.broadcast %cst_88 : f32 to vector<16x1xf32>
      %208 = arith.addf %204, %207 : vector<16x1xf32>
      %209 = math.rsqrt %208 : vector<16x1xf32>
      %210 = vector.broadcast %209 : vector<16x1xf32> to vector<16x32xf32>
      %211 = arith.mulf %206, %210 : vector<16x32xf32>
      %212 = vector.broadcast %192 : vector<1x32xf32> to vector<16x32xf32>
      %213 = arith.mulf %211, %212 : vector<16x32xf32>
      %214 = vector.broadcast %193 : vector<1x32xf32> to vector<16x32xf32>
      %215 = arith.addf %213, %214 : vector<16x32xf32>
      %216 = vector.shape_cast %215 : vector<16x32xf32> to vector<2x8x32xf32>
      %c0_89 = arith.constant 0 : index
      %c0_90 = arith.constant 0 : index
      %c0_91 = arith.constant 0 : index
      %217 = vector.load %arg17[%c0_89, %c0_90, %c0_91] : memref<2x8x32xf32, #tpu.memory_space<vmem>>, vector<2x8x32xf32>
      tpu.vector_store %arg17[%c0_89, %c0_90, %c0_91], %216 {strides = array<i32>} : memref<2x8x32xf32, #tpu.memory_space<vmem>>, vector<2x8x32xf32>,
    } else {
    }
    return
  }
  func.func @transform_0(%arg0: i32, %arg1: i32, %arg2: memref<2xf32, #tpu.memory_space<smem>>) -> (i32, i32, i32) {
    %c0_i32 = arith.constant 0 : i32
    %c0_i32_0 = arith.constant 0 : i32
    %c0_i32_1 = arith.constant 0 : i32
    return %arg0, %c0_i32, %c0_i32_0 : i32, i32, i32
  }
  func.func @transform_1(%arg0: i32, %arg1: i32, %arg2: memref<2xf32, #tpu.memory_space<smem>>) -> (i32, i32, i32) {
    %c0_i32 = arith.constant 0 : i32
    %c0_i32_0 = arith.constant 0 : i32
    %c0_i32_1 = arith.constant 0 : i32
    return %arg1, %c0_i32, %c0_i32_0 : i32, i32, i32
  }
  func.func @transform_2(%arg0: i32, %arg1: i32, %arg2: memref<2xf32, #tpu.memory_space<smem>>) -> (i32, i32, i32) {
    %c0_i32 = arith.constant 0 : i32
    %c0_i32_0 = arith.constant 0 : i32
    %c0_i32_1 = arith.constant 0 : i32
    return %arg1, %c0_i32, %c0_i32_0 : i32, i32, i32
  }
  func.func @transform_3(%arg0: i32, %arg1: i32, %arg2: memref<2xf32, #tpu.memory_space<smem>>) -> (i32, i32, i32) {
    %c0_i32 = arith.constant 0 : i32
    %c0_i32_0 = arith.constant 0 : i32
    %c0_i32_1 = arith.constant 0 : i32
    return %arg1, %c0_i32, %c0_i32_0 : i32, i32, i32
  }
  func.func @transform_4(%arg0: i32, %arg1: i32, %arg2: memref<2xf32, #tpu.memory_space<smem>>) -> (i32, i32, i32) {
    %c0_i32 = arith.constant 0 : i32
    %c0_i32_0 = arith.constant 0 : i32
    %c0_i32_1 = arith.constant 0 : i32
    return %arg1, %c0_i32, %c0_i32_0 : i32, i32, i32
  }
  func.func @transform_5(%arg0: i32, %arg1: i32, %arg2: memref<2xf32, #tpu.memory_space<smem>>) -> (i32, i32, i32) {
    %c0_i32 = arith.constant 0 : i32
    %c0_i32_0 = arith.constant 0 : i32
    %c0_i32_1 = arith.constant 0 : i32
    return %arg1, %c0_i32, %c0_i32_0 : i32, i32, i32
  }
  func.func @transform_6(%arg0: i32, %arg1: i32, %arg2: memref<2xf32, #tpu.memory_space<smem>>) -> (i32, i32, i32) {
    %c0_i32 = arith.constant 0 : i32
    %c0_i32_0 = arith.constant 0 : i32
    %c0_i32_1 = arith.constant 0 : i32
    return %arg1, %c0_i32, %c0_i32_0 : i32, i32, i32
  }
  func.func @transform_7(%arg0: i32, %arg1: i32, %arg2: memref<2xf32, #tpu.memory_space<smem>>) -> (i32, i32, i32) {
    %c0_i32 = arith.constant 0 : i32
    %c0_i32_0 = arith.constant 0 : i32
    %c0_i32_1 = arith.constant 0 : i32
    return %arg1, %c0_i32, %c0_i32_0 : i32, i32, i32
  }
  func.func @transform_8(%arg0: i32, %arg1: i32, %arg2: memref<2xf32, #tpu.memory_space<smem>>) -> (i32, i32, i32) {
    %c0_i32 = arith.constant 0 : i32
    %c0_i32_0 = arith.constant 0 : i32
    %c0_i32_1 = arith.constant 0 : i32
    return %arg1, %c0_i32, %c0_i32_0 : i32, i32, i32
  }
  func.func @transform_9(%arg0: i32, %arg1: i32, %arg2: memref<2xf32, #tpu.memory_space<smem>>) -> (i32, i32, i32) {
    %c0_i32 = arith.constant 0 : i32
    %c0_i32_0 = arith.constant 0 : i32
    %c0_i32_1 = arith.constant 0 : i32
    return %arg1, %c0_i32, %c0_i32_0 : i32, i32, i32
  }
  func.func @transform_10(%arg0: i32, %arg1: i32, %arg2: memref<2xf32, #tpu.memory_space<smem>>) -> (i32, i32, i32) {
    %c0_i32 = arith.constant 0 : i32
    %c0_i32_0 = arith.constant 0 : i32
    %c0_i32_1 = arith.constant 0 : i32
    return %arg1, %c0_i32, %c0_i32_0 : i32, i32, i32
  }
  func.func @transform_11(%arg0: i32, %arg1: i32, %arg2: memref<2xf32, #tpu.memory_space<smem>>) -> (i32, i32, i32) {
    %c0_i32 = arith.constant 0 : i32
    %c0_i32_0 = arith.constant 0 : i32
    %c0_i32_1 = arith.constant 0 : i32
    return %arg1, %c0_i32, %c0_i32_0 : i32, i32, i32
  }
  func.func @transform_12(%arg0: i32, %arg1: i32, %arg2: memref<2xf32, #tpu.memory_space<smem>>) -> (i32, i32) {
    %c0_i32 = arith.constant 0 : i32
    %c0_i32_0 = arith.constant 0 : i32
    %c0_i32_1 = arith.constant 0 : i32
    return %c0_i32, %c0_i32_0 : i32, i32
  }
  func.func @transform_13(%arg0: i32, %arg1: i32, %arg2: memref<2xf32, #tpu.memory_space<smem>>) -> (i32, i32) {
    %c0_i32 = arith.constant 0 : i32
    %c0_i32_0 = arith.constant 0 : i32
    %c0_i32_1 = arith.constant 0 : i32
    return %c0_i32, %c0_i32_0 : i32, i32
  }
  func.func @transform_14(%arg0: i32, %arg1: i32, %arg2: memref<2xf32, #tpu.memory_space<smem>>) -> (i32, i32, i32) {
    %c0_i32 = arith.constant 0 : i32
    %c0_i32_0 = arith.constant 0 : i32
    %c0_i32_1 = arith.constant 0 : i32
    return %arg0, %c0_i32, %c0_i32_0 : i32, i32, i32
  }
}

</mosaic_0001>

<llo_original>
// kernel: tpu_custom_call.1
$region0: #{tpu_custom_call.1}
  #allocation0 [shape = 'u32[]', space=smem, size = 0x4, offset = 0x4, fixed_abs, tag = 'smem constant byte address 0x4 - core index']
  #allocation1 [shape = 'u32[144,128]{1,0:T(1,128)}', space=vmem, size = 0x12000, scoped, tag = 'internal scratch']
  #allocation2 [shape = 'f32[16,32]{1,0:T(8,128)}', space=vmem, size = 0x2000, scoped, tag = 'scratch operand']
  #allocation3 [shape = 's32[1]{0}', space=sflag, size = 0x4, scoped, tag = 'scoped memory for tpu_custom_call.1']
  #allocation4 [shape = 'u8[512]{0}', space=smem, size = 0x200, scoped, tag = 'prefetched SMEM operand 0']
  %s0 = inlined_call_operand.hbm [shape: f32[2], index: 0, kind: input, shape index: {}]
  %s1 = inlined_call_operand.hbm [shape: f32[2,8,32], index: 1, kind: input, shape index: {}]
  %s2 = inlined_call_operand.vmem [shape: f32[2,1,32], index: 2, kind: input, shape index: {}]
  %s3 = inlined_call_operand.vmem [shape: f32[2,1,32], index: 3, kind: input, shape index: {}]
  %s4 = inlined_call_operand.vmem [shape: bf16[2,32,96], index: 4, kind: input, shape index: {}]
  %s5 = inlined_call_operand.vmem [shape: bf16[2,32,32], index: 5, kind: input, shape index: {}]
  %s6 = inlined_call_operand.vmem [shape: f32[2,1,32], index: 6, kind: input, shape index: {}]
  %s7 = inlined_call_operand.vmem [shape: f32[2,1,32], index: 7, kind: input, shape index: {}]
  %s8 = inlined_call_operand.hbm [shape: f32[2,1,32], index: 8, kind: input, shape index: {}]
  %s9 = inlined_call_operand.vmem [shape: bf16[2,32,64], index: 9, kind: input, shape index: {}]
  %s10 = inlined_call_operand.hbm [shape: f32[2,1,64], index: 10, kind: input, shape index: {}]
  %s11 = inlined_call_operand.vmem [shape: bf16[2,64,32], index: 11, kind: input, shape index: {}]
  %s12 = inlined_call_operand.vmem [shape: f32[2,1,32], index: 12, kind: input, shape index: {}]
  %s13 = inlined_call_operand.vmem [shape: f32[1,32], index: 13, kind: input, shape index: {}]
  %s14 = inlined_call_operand.vmem [shape: f32[1,32], index: 14, kind: input, shape index: {}]
  %s15 = inlined_call_operand.hbm [shape: f32[2,8,32], index: 15, kind: output, shape index: {}]
  %s16 = sld [smem:[#allocation0]]
  $region113: #{tpu_custom_call.1} parent=0
    _
  %s18 = ssub.s32 1, %s16
  %s19 = scalar_select 0, %s18, %s16
  %21 = dma.hbm_to_smem %s0, 16, [#allocation4], [#allocation3]
  %22 = dma.done [#allocation3], 16
  %23 = sfence
  $region1: #{tpu_custom_call.1} parent=0
    #allocation5 [shape = 'u8[8192]{0}', space=vmem, size = 0x2000, scoped, tag = 'input window, operand 1, single buffered']
    #allocation6 [shape = 's32[2]{0}', space=sflag, size = 0x8, scoped, tag = 'scoped memory for tpu_custom_call.1']
    #allocation7 [shape = 's32[2]{0}', space=sflag, size = 0x8, scoped, tag = 'scoped memory for tpu_custom_call.1']
    #allocation8 [shape = 'u8[1024]{0}', space=vmem, size = 0x400, scoped, tag = 'input window, operand 8']
    #allocation9 [shape = 's32[2]{0}', space=sflag, size = 0x8, scoped, tag = 'scoped memory for tpu_custom_call.1']
    #allocation10 [shape = 'u8[1024]{0}', space=vmem, size = 0x400, scoped, tag = 'input window, operand 10']
    #allocation11 [shape = 'u8[8192]{0}', space=vmem, size = 0x2000, scoped, tag = 'output window, operand 0, single buffered']
    %24 = vsyncpa [#allocation6], 0
    %25 = vsyncpa [#allocation9], 0
    %s26 = scalar_lea.sflag [#allocation9], 1
    %27 = vsyncpa %s26, 0
    %28 = vsyncpa [#allocation7], 0
    loop: start=0, step=1, limit=4
    $region2: #{tpu_custom_call.1} parent=1 // loop_pre_header
      _
    $region3: #{tpu_custom_call.1} parent=1 // loop_header
      %s30 = sphi 0, %s34
      %p31 = scmp.ge.s32.totalorder %s30, 4
      %s37 = sphi 0, %s49
      %s38 = sphi 0, %s45
      %s39 = sphi 0, %s37
      %s40 = sphi 0, %s38
      %s41 = sphi 0, %s39
      %s42 = sphi 0, %s40
      %s52 = sphi 0, %s54
      %s55 = sphi 0, %s52
      %s56 = sphi 0, %s55
      %s72 = sphi 0, %s56
      %s78 = sphi 0, %s80
      %s81 = sphi 0, %s78
      %s82 = sphi 0, %s81
      %s98 = sphi 0, %s82
      %s104 = sphi 0, %s106
      %s107 = sphi 0, %s104
      %s108 = sphi 0, %s107
      %s124 = sphi 0, %s108
      %s130 = sphi 0, %s132
      %s133 = sphi 0, %s130
      %s134 = sphi 0, %s133
      %s150 = sphi 0, %s134
      %s156 = sphi 0, %s158
      %s159 = sphi 0, %s156
      %s160 = sphi 0, %s159
      %s176 = sphi 0, %s160
      %s182 = sphi 0, %s184
      %s185 = sphi 0, %s182
      %s186 = sphi 0, %s185
      %s202 = sphi 0, %s186
      %s208 = sphi 0, %s210
      %s211 = sphi 0, %s208
      %s212 = sphi 0, %s211
      %s228 = sphi 0, %s212
      %s234 = sphi 0, %s236
      %s237 = sphi 0, %s234
      %s238 = sphi 0, %s237
      %s254 = sphi 0, %s238
      %s260 = sphi 0, %s262
      %s263 = sphi 0, %s260
      %s264 = sphi 0, %s263
      %s280 = sphi 0, %s264
      %s286 = sphi 0, %s288
      %s289 = sphi 0, %s286
      %s290 = sphi 0, %s289
      %s306 = sphi 0, %s290
      %s312 = sphi 0, %s314
      %s315 = sphi 0, %s312
      %s316 = sphi 0, %s315
      %s332 = sphi 0, %s316
      %s338 = sphi 0, %s340
      %s341 = sphi 0, %s338
      %s342 = sphi 0, %s341
      %s358 = sphi 0, %s342
      %s362 = sphi 0, %s362
      %s364 = sphi 0, %s362
      %s365 = sphi 0, %s364
      %s379 = sphi 0, %s365
      %s383 = sphi 0, %s383
      %s385 = sphi 0, %s383
      %s386 = sphi 0, %s385
      %s400 = sphi 0, %s386
      %s406 = sphi 0, %s408
      %s409 = sphi 0, %s406
      %s410 = sphi 0, %s409
      %s426 = sphi 0, %s410
    $region4: #{tpu_custom_call.1} parent=1 // loop_header_branch
      %33 = sbr.rel (%p31) target = $region8
    $region5: #{tpu_custom_call.1} parent=1 // loop_body
      %s35 = ssub.s32 %s30, 1
      %s36 = ssub.s32 %s30, 2
      %s43 = sadd.s32 1, %s38
      %p44 = scmp.ge.s32.totalorder %s43, 2
      %s45 = scalar_select %p44, 0, %s43
      %s46 = sadd.s32 1, %s37
      %s47 = scalar_select %p44, %s46, %s37
      %p48 = scmp.ge.s32.totalorder %s47, 1
      %s49 = scalar_select %p48, 0, %s47
      %s50 = ssub.s32 %s37, %s49
      %p51 = scmp.eq.s32.totalorder %s50, 0
      %s53 = sadd.s32 %s52, 1
      %s54 = scalar_select %p51, %s52, %s53
      %p57 = pneg %p51
      %p58 = scmp.eq.s32.totalorder %s30, 1
      %p59 = por %p57, %p58
      %p60 = scmp.ne.s32.totalorder %s52, %s55
      %p61 = scmp.eq.s32.totalorder %s30, 0
      %p62 = por %p60, %p61
      %p63 = scmp.ne.s32.totalorder %s52, %s55
      %p64 = scmp.eq.s32.totalorder %s35, 1
      %p65 = por %p63, %p64
      %p66 = scmp.ne.s32.totalorder %s55, %s56
      %p67 = scmp.eq.s32.totalorder %s35, 0
      %p68 = por %p66, %p67
      %p69 = scmp.ne.s32.totalorder %s55, %s56
      %p70 = scmp.eq.s32.totalorder %s36, 1
      %p71 = por %p69, %p70
      %p73 = scmp.ne.s32.totalorder %s56, %s72
      %p74 = scmp.eq.s32.totalorder %s36, 0
      %p75 = por %p73, %p74
      %s76 = ssub.s32 %s38, %s45
      %p77 = scmp.eq.s32.totalorder %s76, 0
      %s79 = sadd.s32 %s78, 1
      %s80 = scalar_select %p77, %s78, %s79
      %p83 = pneg %p77
      %p84 = scmp.eq.s32.totalorder %s30, 1
      %p85 = por %p83, %p84
      %p86 = scmp.ne.s32.totalorder %s78, %s81
      %p87 = scmp.eq.s32.totalorder %s30, 0
      %p88 = por %p86, %p87
      %p89 = scmp.ne.s32.totalorder %s78, %s81
      %p90 = scmp.eq.s32.totalorder %s35, 1
      %p91 = por %p89, %p90
      %p92 = scmp.ne.s32.totalorder %s81, %s82
      %p93 = scmp.eq.s32.totalorder %s35, 0
      %p94 = por %p92, %p93
      %p95 = scmp.ne.s32.totalorder %s81, %s82
      %p96 = scmp.eq.s32.totalorder %s36, 1
      %p97 = por %p95, %p96
      %p99 = scmp.ne.s32.totalorder %s82, %s98
      %p100 = scmp.eq.s32.totalorder %s36, 0
      %p101 = por %p99, %p100
      %s102 = ssub.s32 %s38, %s45
      %p103 = scmp.eq.s32.totalorder %s102, 0
      %s105 = sadd.s32 %s104, 1
      %s106 = scalar_select %p103, %s104, %s105
      %p109 = pneg %p103
      %p110 = scmp.eq.s32.totalorder %s30, 1
      %p111 = por %p109, %p110
      %p112 = scmp.ne.s32.totalorder %s104, %s107
      %p113 = scmp.eq.s32.totalorder %s30, 0
      %p114 = por %p112, %p113
      %p115 = scmp.ne.s32.totalorder %s104, %s107
      %p116 = scmp.eq.s32.totalorder %s35, 1
      %p117 = por %p115, %p116
      %p118 = scmp.ne.s32.totalorder %s107, %s108
      %p119 = scmp.eq.s32.totalorder %s35, 0
      %p120 = por %p118, %p119
      %p121 = scmp.ne.s32.totalorder %s107, %s108
      %p122 = scmp.eq.s32.totalorder %s36, 1
      %p123 = por %p121, %p122
      %p125 = scmp.ne.s32.totalorder %s108, %s124
      %p126 = scmp.eq.s32.totalorder %s36, 0
      %p127 = por %p125, %p126
      %s128 = ssub.s32 %s38, %s45
      %p129 = scmp.eq.s32.totalorder %s128, 0
      %s131 = sadd.s32 %s130, 1
      %s132 = scalar_select %p129, %s130, %s131
      %p135 = pneg %p129
      %p136 = scmp.eq.s32.totalorder %s30, 1
      %p137 = por %p135, %p136
      %p138 = scmp.ne.s32.totalorder %s130, %s133
      %p139 = scmp.eq.s32.totalorder %s30, 0
      %p140 = por %p138, %p139
      %p141 = scmp.ne.s32.totalorder %s130, %s133
      %p142 = scmp.eq.s32.totalorder %s35, 1
      %p143 = por %p141, %p142
      %p144 = scmp.ne.s32.totalorder %s133, %s134
      %p145 = scmp.eq.s32.totalorder %s35, 0
      %p146 = por %p144, %p145
      %p147 = scmp.ne.s32.totalorder %s133, %s134
      %p148 = scmp.eq.s32.totalorder %s36, 1
      %p149 = por %p147, %p148
      %p151 = scmp.ne.s32.totalorder %s134, %s150
      %p152 = scmp.eq.s32.totalorder %s36, 0
      %p153 = por %p151, %p152
      %s154 = ssub.s32 %s38, %s45
      %p155 = scmp.eq.s32.totalorder %s154, 0
      %s157 = sadd.s32 %s156, 1
      %s158 = scalar_select %p155, %s156, %s157
      %p161 = pneg %p155
      %p162 = scmp.eq.s32.totalorder %s30, 1
      %p163 = por %p161, %p162
      %p164 = scmp.ne.s32.totalorder %s156, %s159
      %p165 = scmp.eq.s32.totalorder %s30, 0
      %p166 = por %p164, %p165
      %p167 = scmp.ne.s32.totalorder %s156, %s159
      %p168 = scmp.eq.s32.totalorder %s35, 1
      %p169 = por %p167, %p168
      %p170 = scmp.ne.s32.totalorder %s159, %s160
      %p171 = scmp.eq.s32.totalorder %s35, 0
      %p172 = por %p170, %p171
      %p173 = scmp.ne.s32.totalorder %s159, %s160
      %p174 = scmp.eq.s32.totalorder %s36, 1
      %p175 = por %p173, %p174
      %p177 = scmp.ne.s32.totalorder %s160, %s176
      %p178 = scmp.eq.s32.totalorder %s36, 0
      %p179 = por %p177, %p178
      %s180 = ssub.s32 %s38, %s45
      %p181 = scmp.eq.s32.totalorder %s180, 0
      %s183 = sadd.s32 %s182, 1
      %s184 = scalar_select %p181, %s182, %s183
      %p187 = pneg %p181
      %p188 = scmp.eq.s32.totalorder %s30, 1
      %p189 = por %p187, %p188
      %p190 = scmp.ne.s32.totalorder %s182, %s185
      %p191 = scmp.eq.s32.totalorder %s30, 0
      %p192 = por %p190, %p191
      %p193 = scmp.ne.s32.totalorder %s182, %s185
      %p194 = scmp.eq.s32.totalorder %s35, 1
      %p195 = por %p193, %p194
      %p196 = scmp.ne.s32.totalorder %s185, %s186
      %p197 = scmp.eq.s32.totalorder %s35, 0
      %p198 = por %p196, %p197
      %p199 = scmp.ne.s32.totalorder %s185, %s186
      %p200 = scmp.eq.s32.totalorder %s36, 1
      %p201 = por %p199, %p200
      %p203 = scmp.ne.s32.totalorder %s186, %s202
      %p204 = scmp.eq.s32.totalorder %s36, 0
      %p205 = por %p203, %p204
      %s206 = ssub.s32 %s38, %s45
      %p207 = scmp.eq.s32.totalorder %s206, 0
      %s209 = sadd.s32 %s208, 1
      %s210 = scalar_select %p207, %s208, %s209
      %p213 = pneg %p207
      %p214 = scmp.eq.s32.totalorder %s30, 1
      %p215 = por %p213, %p214
      %p216 = scmp.ne.s32.totalorder %s208, %s211
      %p217 = scmp.eq.s32.totalorder %s30, 0
      %p218 = por %p216, %p217
      %p219 = scmp.ne.s32.totalorder %s208, %s211
      %p220 = scmp.eq.s32.totalorder %s35, 1
      %p221 = por %p219, %p220
      %p222 = scmp.ne.s32.totalorder %s211, %s212
      %p223 = scmp.eq.s32.totalorder %s35, 0
      %p224 = por %p222, %p223
      %p225 = scmp.ne.s32.totalorder %s211, %s212
      %p226 = scmp.eq.s32.totalorder %s36, 1
      %p227 = por %p225, %p226
      %p229 = scmp.ne.s32.totalorder %s212, %s228
      %p230 = scmp.eq.s32.totalorder %s36, 0
      %p231 = por %p229, %p230
      %s232 = ssub.s32 %s38, %s45
      %p233 = scmp.eq.s32.totalorder %s232, 0
      %s235 = sadd.s32 %s234, 1
      %s236 = scalar_select %p233, %s234, %s235
      %p239 = pneg %p233
      %p240 = scmp.eq.s32.totalorder %s30, 1
      %p241 = por %p239, %p240
      %p242 = scmp.ne.s32.totalorder %s234, %s237
      %p243 = scmp.eq.s32.totalorder %s30, 0
      %p244 = por %p242, %p243
      %p245 = scmp.ne.s32.totalorder %s234, %s237
      %p246 = scmp.eq.s32.totalorder %s35, 1
      %p247 = por %p245, %p246
      %p248 = scmp.ne.s32.totalorder %s237, %s238
      %p249 = scmp.eq.s32.totalorder %s35, 0
      %p250 = por %p248, %p249
      %p251 = scmp.ne.s32.totalorder %s237, %s238
      %p252 = scmp.eq.s32.totalorder %s36, 1
      %p253 = por %p251, %p252
      %p255 = scmp.ne.s32.totalorder %s238, %s254
      %p256 = scmp.eq.s32.totalorder %s36, 0
      %p257 = por %p255, %p256
      %s258 = ssub.s32 %s38, %s45
      %p259 = scmp.eq.s32.totalorder %s258, 0
      %s261 = sadd.s32 %s260, 1
      %s262 = scalar_select %p259, %s260, %s261
      %p265 = pneg %p259
      %p266 = scmp.eq.s32.totalorder %s30, 1
      %p267 = por %p265, %p266
      %p268 = scmp.ne.s32.totalorder %s260, %s263
      %p269 = scmp.eq.s32.totalorder %s30, 0
      %p270 = por %p268, %p269
      %p271 = scmp.ne.s32.totalorder %s260, %s263
      %p272 = scmp.eq.s32.totalorder %s35, 1
      %p273 = por %p271, %p272
      %p274 = scmp.ne.s32.totalorder %s263, %s264
      %p275 = scmp.eq.s32.totalorder %s35, 0
      %p276 = por %p274, %p275
      %p277 = scmp.ne.s32.totalorder %s263, %s264
      %p278 = scmp.eq.s32.totalorder %s36, 1
      %p279 = por %p277, %p278
      %p281 = scmp.ne.s32.totalorder %s264, %s280
      %p282 = scmp.eq.s32.totalorder %s36, 0
      %p283 = por %p281, %p282
      %s284 = ssub.s32 %s38, %s45
      %p285 = scmp.eq.s32.totalorder %s284, 0
      %s287 = sadd.s32 %s286, 1
      %s288 = scalar_select %p285, %s286, %s287
      %p291 = pneg %p285
      %p292 = scmp.eq.s32.totalorder %s30, 1
      %p293 = por %p291, %p292
      %p294 = scmp.ne.s32.totalorder %s286, %s289
      %p295 = scmp.eq.s32.totalorder %s30, 0
      %p296 = por %p294, %p295
      %p297 = scmp.ne.s32.totalorder %s286, %s289
      %p298 = scmp.eq.s32.totalorder %s35, 1
      %p299 = por %p297, %p298
      %p300 = scmp.ne.s32.totalorder %s289, %s290
      %p301 = scmp.eq.s32.totalorder %s35, 0
      %p302 = por %p300, %p301
      %p303 = scmp.ne.s32.totalorder %s289, %s290
      %p304 = scmp.eq.s32.totalorder %s36, 1
      %p305 = por %p303, %p304
      %p307 = scmp.ne.s32.totalorder %s290, %s306
      %p308 = scmp.eq.s32.totalorder %s36, 0
      %p309 = por %p307, %p308
      %s310 = ssub.s32 %s38, %s45
      %p311 = scmp.eq.s32.totalorder %s310, 0
      %s313 = sadd.s32 %s312, 1
      %s314 = scalar_select %p311, %s312, %s313
      %p317 = pneg %p311
      %p318 = scmp.eq.s32.totalorder %s30, 1
      %p319 = por %p317, %p318
      %p320 = scmp.ne.s32.totalorder %s312, %s315
      %p321 = scmp.eq.s32.totalorder %s30, 0
      %p322 = por %p320, %p321
      %p323 = scmp.ne.s32.totalorder %s312, %s315
      %p324 = scmp.eq.s32.totalorder %s35, 1
      %p325 = por %p323, %p324
      %p326 = scmp.ne.s32.totalorder %s315, %s316
      %p327 = scmp.eq.s32.totalorder %s35, 0
      %p328 = por %p326, %p327
      %p329 = scmp.ne.s32.totalorder %s315, %s316
      %p330 = scmp.eq.s32.totalorder %s36, 1
      %p331 = por %p329, %p330
      %p333 = scmp.ne.s32.totalorder %s316, %s332
      %p334 = scmp.eq.s32.totalorder %s36, 0
      %p335 = por %p333, %p334
      %s336 = ssub.s32 %s38, %s45
      %p337 = scmp.eq.s32.totalorder %s336, 0
      %s339 = sadd.s32 %s338, 1
      %s340 = scalar_select %p337, %s338, %s339
      %p343 = pneg %p337
      %p344 = scmp.eq.s32.totalorder %s30, 1
      %p345 = por %p343, %p344
      %p346 = scmp.ne.s32.totalorder %s338, %s341
      %p347 = scmp.eq.s32.totalorder %s30, 0
      %p348 = por %p346, %p347
      %p349 = scmp.ne.s32.totalorder %s338, %s341
      %p350 = scmp.eq.s32.totalorder %s35, 1
      %p351 = por %p349, %p350
      %p352 = scmp.ne.s32.totalorder %s341, %s342
      %p353 = scmp.eq.s32.totalorder %s35, 0
      %p354 = por %p352, %p353
      %p355 = scmp.ne.s32.totalorder %s341, %s342
      %p356 = scmp.eq.s32.totalorder %s36, 1
      %p357 = por %p355, %p356
      %p359 = scmp.ne.s32.totalorder %s342, %s358
      %p360 = scmp.eq.s32.totalorder %s36, 0
      %p361 = por %p359, %p360
      %s363 = sadd.s32 %s362, 1
      %p366 = scmp.eq.s32.totalorder %s30, 1
      %p367 = scmp.ne.s32.totalorder %s362, %s364
      %p368 = scmp.eq.s32.totalorder %s30, 0
      %p369 = por %p367, %p368
      %p370 = scmp.ne.s32.totalorder %s362, %s364
      %p371 = scmp.eq.s32.totalorder %s35, 1
      %p372 = por %p370, %p371
      %p373 = scmp.ne.s32.totalorder %s364, %s365
      %p374 = scmp.eq.s32.totalorder %s35, 0
      %p375 = por %p373, %p374
      %p376 = scmp.ne.s32.totalorder %s364, %s365
      %p377 = scmp.eq.s32.totalorder %s36, 1
      %p378 = por %p376, %p377
      %p380 = scmp.ne.s32.totalorder %s365, %s379
      %p381 = scmp.eq.s32.totalorder %s36, 0
      %p382 = por %p380, %p381
      %s384 = sadd.s32 %s383, 1
      %p387 = scmp.eq.s32.totalorder %s30, 1
      %p388 = scmp.ne.s32.totalorder %s383, %s385
      %p389 = scmp.eq.s32.totalorder %s30, 0
      %p390 = por %p388, %p389
      %p391 = scmp.ne.s32.totalorder %s383, %s385
      %p392 = scmp.eq.s32.totalorder %s35, 1
      %p393 = por %p391, %p392
      %p394 = scmp.ne.s32.totalorder %s385, %s386
      %p395 = scmp.eq.s32.totalorder %s35, 0
      %p396 = por %p394, %p395
      %p397 = scmp.ne.s32.totalorder %s385, %s386
      %p398 = scmp.eq.s32.totalorder %s36, 1
      %p399 = por %p397, %p398
      %p401 = scmp.ne.s32.totalorder %s386, %s400
      %p402 = scmp.eq.s32.totalorder %s36, 0
      %p403 = por %p401, %p402
      %s404 = ssub.s32 %s37, %s49
      %p405 = scmp.eq.s32.totalorder %s404, 0
      %s407 = sadd.s32 %s406, 1
      %s408 = scalar_select %p405, %s406, %s407
      %p411 = pneg %p405
      %p412 = scmp.eq.s32.totalorder %s30, 1
      %p413 = por %p411, %p412
      %p414 = scmp.ne.s32.totalorder %s406, %s409
      %p415 = scmp.eq.s32.totalorder %s30, 0
      %p416 = por %p414, %p415
      %p417 = scmp.ne.s32.totalorder %s406, %s409
      %p418 = scmp.eq.s32.totalorder %s35, 1
      %p419 = por %p417, %p418
      %p420 = scmp.ne.s32.totalorder %s409, %s410
      %p421 = scmp.eq.s32.totalorder %s35, 0
      %p422 = por %p420, %p421
      %p423 = scmp.ne.s32.totalorder %s409, %s410
      %p424 = scmp.eq.s32.totalorder %s36, 1
      %p425 = por %p423, %p424
      %p427 = scmp.ne.s32.totalorder %s410, %s426
      %p428 = scmp.eq.s32.totalorder %s36, 0
      %p429 = por %p427, %p428
      %p430 = scmp.le.s32.totalorder 1, %s30
      %p431 = scmp.lt.s32.totalorder %s30, 3
      %p432 = pnand %p430, %p431
      %p433 = pneg %p432
      // Predicated region
      $region9: #{tpu_custom_call.1} parent=5 // pred_check
        _
      $region10: #{tpu_custom_call.1} parent=5 // pred_check_branch
        %435 = sbr.rel (%p432) target = $region12
      $region11: #{tpu_custom_call.1} parent=5 // pred_region
        %s436 = ssub.s32 %s30, 1
        // Predicated region
        $region13: #{tpu_custom_call.1} parent=11 // pred_check
          %p437 = pneg %p68
        $region14: #{tpu_custom_call.1} parent=11 // pred_check_branch
          %439 = sbr.rel (%p437) target = $region16
        $region15: #{tpu_custom_call.1} parent=11 // pred_region
          %s440 = smul.u32 2, %s39
          %s442 = ssub.s32 256, 256
          %443 = vsyncadd [#allocation6], %s442
          %s444 = smul.addr %s440, 128
          %s445 = scalar_lea.hbm %s1, %s444
          %s446 = sshll.u32 [#allocation5], 4
          %s447 = int_to_ptr.vmem [resolvable:$true] %s446
          %452 = dma.hbm_to_vmem [thread:$0]  %s445, 256, %s447, [#allocation6], 128, 128, 8
        $region16: #{tpu_custom_call.1} parent=11 // pred_fallthru
          _
        // Predicated region
        $region17: #{tpu_custom_call.1} parent=11 // pred_check
          %p453 = pneg %p375
        $region18: #{tpu_custom_call.1} parent=11 // pred_check_branch
          %455 = sbr.rel (%p453) target = $region20
        $region19: #{tpu_custom_call.1} parent=11 // pred_region
          _
        $region20: #{tpu_custom_call.1} parent=11 // pred_fallthru
          _
        // Predicated region
        $region21: #{tpu_custom_call.1} parent=11 // pred_check
          %p456 = pneg %p396
        $region22: #{tpu_custom_call.1} parent=11 // pred_check_branch
          %458 = sbr.rel (%p456) target = $region24
        $region23: #{tpu_custom_call.1} parent=11 // pred_region
          _
        $region24: #{tpu_custom_call.1} parent=11 // pred_fallthru
          _
      $region12: #{tpu_custom_call.1} parent=5 // pred_fallthru
        _
      %p459 = scmp.lt.s32.totalorder %s30, 2
      // Predicated region
      $region25: #{tpu_custom_call.1} parent=5 // pred_check
        %p460 = pneg %p459
      $region26: #{tpu_custom_call.1} parent=5 // pred_check_branch
        %462 = sbr.rel (%p460) target = $region28
      $region27: #{tpu_custom_call.1} parent=5 // pred_region
        // Predicated region
        $region29: #{tpu_custom_call.1} parent=27 // pred_check
          %p463 = pneg %p88
        $region30: #{tpu_custom_call.1} parent=27 // pred_check_branch
          %465 = sbr.rel (%p463) target = $region32
        $region31: #{tpu_custom_call.1} parent=27 // pred_region
          %p466 = scmp.lt.s32.totalorder %s38, 1
          %s467 = scalar_select %p466, %s38, 1
          %s468 = scalar_lea.vmem %s2, %s467
        $region32: #{tpu_custom_call.1} parent=27 // pred_fallthru
          _
        // Predicated region
        $region33: #{tpu_custom_call.1} parent=27 // pred_check
          %p469 = pneg %p114
        $region34: #{tpu_custom_call.1} parent=27 // pred_check_branch
          %471 = sbr.rel (%p469) target = $region36
        $region35: #{tpu_custom_call.1} parent=27 // pred_region
          %p472 = scmp.lt.s32.totalorder %s38, 1
          %s473 = scalar_select %p472, %s38, 1
          %s474 = scalar_lea.vmem %s3, %s473
        $region36: #{tpu_custom_call.1} parent=27 // pred_fallthru
          _
        // Predicated region
        $region37: #{tpu_custom_call.1} parent=27 // pred_check
          %p475 = pneg %p140
        $region38: #{tpu_custom_call.1} parent=27 // pred_check_branch
          %477 = sbr.rel (%p475) target = $region40
        $region39: #{tpu_custom_call.1} parent=27 // pred_region
          %p478 = scmp.lt.s32.totalorder %s38, 1
          %s479 = scalar_select %p478, %s38, 1
          %s480 = smul.addr %s479, 4
          %s481 = smul.addr %s480, 4
          %s482 = scalar_lea.vmem %s4, %s481
        $region40: #{tpu_custom_call.1} parent=27 // pred_fallthru
          _
        // Predicated region
        $region41: #{tpu_custom_call.1} parent=27 // pred_check
          %p483 = pneg %p166
        $region42: #{tpu_custom_call.1} parent=27 // pred_check_branch
          %485 = sbr.rel (%p483) target = $region44
        $region43: #{tpu_custom_call.1} parent=27 // pred_region
          %p486 = scmp.lt.s32.totalorder %s38, 1
          %s487 = scalar_select %p486, %s38, 1
          %s488 = smul.addr %s487, 4
          %s489 = smul.addr %s488, 4
          %s490 = scalar_lea.vmem %s5, %s489
        $region44: #{tpu_custom_call.1} parent=27 // pred_fallthru
          _
        // Predicated region
        $region45: #{tpu_custom_call.1} parent=27 // pred_check
          %p491 = pneg %p192
        $region46: #{tpu_custom_call.1} parent=27 // pred_check_branch
          %493 = sbr.rel (%p491) target = $region48
        $region47: #{tpu_custom_call.1} parent=27 // pred_region
          %p494 = scmp.lt.s32.totalorder %s38, 1
          %s495 = scalar_select %p494, %s38, 1
          %s496 = scalar_lea.vmem %s6, %s495
        $region48: #{tpu_custom_call.1} parent=27 // pred_fallthru
          _
        // Predicated region
        $region49: #{tpu_custom_call.1} parent=27 // pred_check
          %p497 = pneg %p218
        $region50: #{tpu_custom_call.1} parent=27 // pred_check_branch
          %499 = sbr.rel (%p497) target = $region52
        $region51: #{tpu_custom_call.1} parent=27 // pred_region
          %p500 = scmp.lt.s32.totalorder %s38, 1
          %s501 = scalar_select %p500, %s38, 1
          %s502 = scalar_lea.vmem %s7, %s501
        $region52: #{tpu_custom_call.1} parent=27 // pred_fallthru
          _
        // Predicated region
        $region53: #{tpu_custom_call.1} parent=27 // pred_check
          %p503 = pneg %p244
        $region54: #{tpu_custom_call.1} parent=27 // pred_check_branch
          %505 = sbr.rel (%p503) target = $region56
        $region55: #{tpu_custom_call.1} parent=27 // pred_region
          %s506 = sand.u32 %s30, 1
          %s507 = scalar_lea.sflag [#allocation9], %s506
          %s508 = sand.u32 %s234, 1
          %s509 = scalar_lea.vmem [#allocation8], %s508
          %s511 = ssub.s32 16, 16
          %512 = vsyncadd %s507, %s511
          %s513 = smul.addr %s38, 16
          %s514 = scalar_lea.hbm %s8, %s513
          %s516 = sshll.u32 %s509, 4
          %s517 = int_to_ptr.vmem [resolvable:$true] %s516
          %519 = dma.hbm_to_vmem [thread:$0]  %s514, 16, %s517, %s507
        $region56: #{tpu_custom_call.1} parent=27 // pred_fallthru
          _
        // Predicated region
        $region57: #{tpu_custom_call.1} parent=27 // pred_check
          %p520 = pneg %p270
        $region58: #{tpu_custom_call.1} parent=27 // pred_check_branch
          %522 = sbr.rel (%p520) target = $region60
        $region59: #{tpu_custom_call.1} parent=27 // pred_region
          %p523 = scmp.lt.s32.totalorder %s38, 1
          %s524 = scalar_select %p523, %s38, 1
          %s525 = smul.addr %s524, 4
          %s526 = smul.addr %s525, 4
          %s527 = scalar_lea.vmem %s9, %s526
        $region60: #{tpu_custom_call.1} parent=27 // pred_fallthru
          _
        // Predicated region
        $region61: #{tpu_custom_call.1} parent=27 // pred_check
          %p528 = pneg %p296
        $region62: #{tpu_custom_call.1} parent=27 // pred_check_branch
          %530 = sbr.rel (%p528) target = $region64
        $region63: #{tpu_custom_call.1} parent=27 // pred_region
          %s531 = sand.u32 %s30, 1
          %s532 = scalar_lea.sflag [#allocation9], %s531
          %s533 = sand.u32 %s286, 1
          %s534 = scalar_lea.vmem [#allocation10], %s533
          %s536 = ssub.s32 16, 16
          %537 = vsyncadd %s532, %s536
          %s538 = smul.addr %s38, 16
          %s539 = scalar_lea.hbm %s10, %s538
          %s541 = sshll.u32 %s534, 4
          %s542 = int_to_ptr.vmem [resolvable:$true] %s541
          %544 = dma.hbm_to_vmem [thread:$0]  %s539, 16, %s542, %s532
        $region64: #{tpu_custom_call.1} parent=27 // pred_fallthru
          _
        // Predicated region
        $region65: #{tpu_custom_call.1} parent=27 // pred_check
          %p545 = pneg %p322
        $region66: #{tpu_custom_call.1} parent=27 // pred_check_branch
          %547 = sbr.rel (%p545) target = $region68
        $region67: #{tpu_custom_call.1} parent=27 // pred_region
          %p548 = scmp.lt.s32.totalorder %s38, 1
          %s549 = scalar_select %p548, %s38, 1
          %s550 = smul.addr %s549, 8
          %s551 = smul.addr %s550, 4
          %s552 = scalar_lea.vmem %s11, %s551
        $region68: #{tpu_custom_call.1} parent=27 // pred_fallthru
          _
        // Predicated region
        $region69: #{tpu_custom_call.1} parent=27 // pred_check
          %p553 = pneg %p348
        $region70: #{tpu_custom_call.1} parent=27 // pred_check_branch
          %555 = sbr.rel (%p553) target = $region72
        $region71: #{tpu_custom_call.1} parent=27 // pred_region
          %p556 = scmp.lt.s32.totalorder %s38, 1
          %s557 = scalar_select %p556, %s38, 1
          %s558 = scalar_lea.vmem %s12, %s557
        $region72: #{tpu_custom_call.1} parent=27 // pred_fallthru
          _
      $region28: #{tpu_custom_call.1} parent=5 // pred_fallthru
        _
      %p559 = scmp.le.s32.totalorder 1, %s30
      %p560 = scmp.lt.s32.totalorder %s30, 3
      %p561 = pnand %p559, %p560
      %p562 = pneg %p561
      // Predicated region
      $region73: #{tpu_custom_call.1} parent=5 // pred_check
        _
      $region74: #{tpu_custom_call.1} parent=5 // pred_check_branch
        %564 = sbr.rel (%p561) target = $region76
      $region75: #{tpu_custom_call.1} parent=5 // pred_region
        %s565 = ssub.s32 %s30, 1
        // Predicated region
        $region77: #{tpu_custom_call.1} parent=75 // pred_check
          %p566 = pneg %p68
        $region78: #{tpu_custom_call.1} parent=75 // pred_check_branch
          %568 = sbr.rel (%p566) target = $region80
        $region79: #{tpu_custom_call.1} parent=75 // pred_region
          %569 = dma.done [#allocation6], 256
        $region80: #{tpu_custom_call.1} parent=75 // pred_fallthru
          _
        %s570 = sand.u32 %s35, 1
        %s571 = scalar_lea.sflag [#allocation9], %s570
        %s572 = sand.u32 %s237, 1
        %s573 = scalar_lea.vmem [#allocation8], %s572
        // Predicated region
        $region81: #{tpu_custom_call.1} parent=75 // pred_check
          %p574 = pneg %p250
        $region82: #{tpu_custom_call.1} parent=75 // pred_check_branch
          %576 = sbr.rel (%p574) target = $region84
        $region83: #{tpu_custom_call.1} parent=75 // pred_region
          %577 = dma.done %s571, 16
        $region84: #{tpu_custom_call.1} parent=75 // pred_fallthru
          _
        %s578 = sand.u32 %s35, 1
        %s579 = scalar_lea.sflag [#allocation9], %s578
        %s580 = sand.u32 %s289, 1
        %s581 = scalar_lea.vmem [#allocation10], %s580
        // Predicated region
        $region85: #{tpu_custom_call.1} parent=75 // pred_check
          %p582 = pneg %p302
        $region86: #{tpu_custom_call.1} parent=75 // pred_check_branch
          %584 = sbr.rel (%p582) target = $region88
        $region87: #{tpu_custom_call.1} parent=75 // pred_region
          %585 = dma.done %s579, 16
        $region88: #{tpu_custom_call.1} parent=75 // pred_fallthru
          _
        %p586 = pneg %p68
        %p587 = pneg %p65
        %p588 = scmp.lt.s32.totalorder %s40, 1
        %s589 = scalar_select %p588, %s40, 1
        %s590 = scalar_lea.vmem %s2, %s589
        %p591 = pneg %p94
        %p592 = pneg %p91
        %p593 = scmp.lt.s32.totalorder %s40, 1
        %s594 = scalar_select %p593, %s40, 1
        %s595 = scalar_lea.vmem %s3, %s594
        %p596 = pneg %p120
        %p597 = pneg %p117
        %p598 = scmp.lt.s32.totalorder %s40, 1
        %s599 = scalar_select %p598, %s40, 1
        %s600 = smul.addr %s599, 4
        %s601 = smul.addr %s600, 4
        %s602 = scalar_lea.vmem %s4, %s601
        %p603 = pneg %p146
        %p604 = pneg %p143
        %p605 = scmp.lt.s32.totalorder %s40, 1
        %s606 = scalar_select %p605, %s40, 1
        %s607 = smul.addr %s606, 4
        %s608 = smul.addr %s607, 4
        %s609 = scalar_lea.vmem %s5, %s608
        %p610 = pneg %p172
        %p611 = pneg %p169
        %p612 = scmp.lt.s32.totalorder %s40, 1
        %s613 = scalar_select %p612, %s40, 1
        %s614 = scalar_lea.vmem %s6, %s613
        %p615 = pneg %p198
        %p616 = pneg %p195
        %p617 = scmp.lt.s32.totalorder %s40, 1
        %s618 = scalar_select %p617, %s40, 1
        %s619 = scalar_lea.vmem %s7, %s618
        %p620 = pneg %p224
        %p621 = pneg %p221
        %s622 = sand.u32 %s35, 1
        %s623 = scalar_lea.sflag [#allocation9], %s622
        %s624 = sand.u32 %s237, 1
        %s625 = scalar_lea.vmem [#allocation8], %s624
        %p626 = pneg %p250
        %p627 = pneg %p247
        %p628 = scmp.lt.s32.totalorder %s40, 1
        %s629 = scalar_select %p628, %s40, 1
        %s630 = smul.addr %s629, 4
        %s631 = smul.addr %s630, 4
        %s632 = scalar_lea.vmem %s9, %s631
        %p633 = pneg %p276
        %p634 = pneg %p273
        %s635 = sand.u32 %s35, 1
        %s636 = scalar_lea.sflag [#allocation9], %s635
        %s637 = sand.u32 %s289, 1
        %s638 = scalar_lea.vmem [#allocation10], %s637
        %p639 = pneg %p302
        %p640 = pneg %p299
        %p641 = scmp.lt.s32.totalorder %s40, 1
        %s642 = scalar_select %p641, %s40, 1
        %s643 = smul.addr %s642, 8
        %s644 = smul.addr %s643, 4
        %s645 = scalar_lea.vmem %s11, %s644
        %p646 = pneg %p328
        %p647 = pneg %p325
        %p648 = scmp.lt.s32.totalorder %s40, 1
        %s649 = scalar_select %p648, %s40, 1
        %s650 = scalar_lea.vmem %s12, %s649
        %p651 = pneg %p354
        %p652 = pneg %p351
        %p653 = pneg %p375
        %p654 = pneg %p372
        %p655 = pneg %p396
        %p656 = pneg %p393
        %p657 = pneg %p422
        %p658 = pneg %p419
        %s659 = smul.u32 2, %s39
        %p660 = scmp.lt.s32.totalorder %s40, 1
        %s661 = scalar_select %p660, %s40, 1
        %s662 = scalar_lea.vmem %s2, %s661
        %p663 = scmp.lt.s32.totalorder %s40, 1
        %s664 = scalar_select %p663, %s40, 1
        %s665 = scalar_lea.vmem %s3, %s664
        %p666 = scmp.lt.s32.totalorder %s40, 1
        %s667 = scalar_select %p666, %s40, 1
        %s668 = smul.addr %s667, 4
        %s669 = smul.addr %s668, 4
        %s670 = scalar_lea.vmem %s4, %s669
        %p671 = scmp.lt.s32.totalorder %s40, 1
        %s672 = scalar_select %p671, %s40, 1
        %s673 = smul.addr %s672, 4
        %s674 = smul.addr %s673, 4
        %s675 = scalar_lea.vmem %s5, %s674
        %p676 = scmp.lt.s32.totalorder %s40, 1
        %s677 = scalar_select %p676, %s40, 1
        %s678 = scalar_lea.vmem %s6, %s677
        %p679 = scmp.lt.s32.totalorder %s40, 1
        %s680 = scalar_select %p679, %s40, 1
        %s681 = scalar_lea.vmem %s7, %s680
        %p682 = scmp.lt.s32.totalorder %s40, 1
        %s683 = scalar_select %p682, %s40, 1
        %s684 = smul.addr %s683, 4
        %s685 = smul.addr %s684, 4
        %s686 = scalar_lea.vmem %s9, %s685
        %p687 = scmp.lt.s32.totalorder %s40, 1
        %s688 = scalar_select %p687, %s40, 1
        %s689 = smul.addr %s688, 8
        %s690 = smul.addr %s689, 4
        %s691 = scalar_lea.vmem %s11, %s690
        %p692 = scmp.lt.s32.totalorder %s40, 1
        %s693 = scalar_select %p692, %s40, 1
        %s694 = scalar_lea.vmem %s12, %s693
        %s695 = smul.u32 2, %s39
        %v697 = vld [vmem:[#allocation5] sm:$0xff]
        %v698 = vld [vmem:[#allocation5 + $0x8] sm:$0xff]
        %p699 = scmp.eq.s32.totalorder %s40, 0
        // Predicated region
        $region89: #{tpu_custom_call.1} parent=75 // pred_check
          %p700 = pneg %p699
        $region90: #{tpu_custom_call.1} parent=75 // pred_check_branch
          %702 = sbr.rel (%p700) target = $region92
        $region91: #{tpu_custom_call.1} parent=75 // pred_region
          %vm703 = vcmask 261120
          %704 = vst.msk [vmem:[#allocation2] sm:$0xff] %vm703, %v697
          %705 = vst.msk [vmem:[#allocation2 + $0x8] sm:$0xff] %vm703, %v698
        $region92: #{tpu_custom_call.1} parent=75 // pred_fallthru
          _
        %p706 = scmp.gt.s32.totalorder %s40, 0
        // Predicated region
        $region93: #{tpu_custom_call.1} parent=75 // pred_check
          %p707 = pneg %p706
        $region94: #{tpu_custom_call.1} parent=75 // pred_check_branch
          %709 = sbr.rel (%p707) target = $region96
        $region95: #{tpu_custom_call.1} parent=75 // pred_region
          %s710 = sld [smem:[#allocation4 + %s40]]
          %v711 = vstv %s710
          %v712 = vmul.f32 %v711, %v697
          %v713 = vmul.f32 %v711, %v698
          %s714 = ssub.f32 1.0, %s710
          %v715 = vld [vmem:[#allocation2] sm:$0xff]
          %v716 = vld [vmem:[#allocation2 + $0x8] sm:$0xff]
          %v717 = vstv %s714
          %v718 = vmul.f32 %v717, %v715
          %v719 = vmul.f32 %v717, %v716
          %v720 = vadd.f32 %v712, %v718
          %v721 = vadd.f32 %v713, %v719
          %vm722 = vcmask 261120
          %723 = vst.msk [vmem:[#allocation2] sm:$0xff] %vm722, %v720
          %724 = vst.msk [vmem:[#allocation2 + $0x8] sm:$0xff] %vm722, %v721
        $region96: #{tpu_custom_call.1} parent=75 // pred_fallthru
          _
        %v725 = vld [vmem:[#allocation2] sm:$0xff]
        %v726 = vld [vmem:[#allocation2 + $0x8] sm:$0xff]
        %v727 = vld [vmem:[%s662] sm:$0x1]
        %v728 = vld [vmem:[%s665] sm:$0x1]
        %vm729 = vcmask 261120
        %v730 = vsel %vm729, %v725, 0.0
        %731 = vadd.xlane.f32.xlu0 %v730
        %v732 = vpop.xlane.xlu0 %731
        %v733 = vsel %vm729, %v726, 0.0
        %734 = vadd.xlane.f32.xlu0 %v733
        %v735 = vpop.xlane.xlu0 %734
        %v736 = vrcp.pop 32.0
        %v737 = vmul.f32 %v732, %v736
        %v738 = vmul.f32 %v735, %v736
        %v739 = vsub.f32 %v725, %v737
        %v740 = vsub.f32 %v726, %v738
        %v741 = vmul.f32 %v739, %v739
        %v742 = vmul.f32 %v740, %v740
        %v743 = vsel %vm729, %v741, 0.0
        %744 = vadd.xlane.f32.xlu0 %v743
        %v745 = vpop.xlane.xlu0 %744
        %v746 = vsel %vm729, %v742, 0.0
        %747 = vadd.xlane.f32.xlu0 %v746
        %v748 = vpop.xlane.xlu0 %747
        %v749 = vmul.f32 %v745, %v736
        %v750 = vmul.f32 %v748, %v736
        %v751 = vadd.f32 %v749, 1e-05
        %v752 = vadd.f32 %v750, 1e-05
        %v753 = vrsqrt.pop %v751
        %v754 = vrsqrt.pop %v752
        %v755 = vmul.f32 %v739, %v753
        %v756 = vmul.f32 %v740, %v754
        %v758 = vlaneseq
        %v759 = vshrl.u32 %v758, 7
        %v760 = vsub.s32 0, %v759
        %v761 = vrot.slane %v727, %v760
        %v763 = vmul.f32 %v755, %v761
        %v764 = vmul.f32 %v756, %v761
        %v766 = vlaneseq
        %v767 = vshrl.u32 %v766, 7
        %v768 = vsub.s32 0, %v767
        %v769 = vrot.slane %v728, %v768
        %v771 = vadd.f32 %v763, %v769
        %v772 = vadd.f32 %v764, %v769
        %v773 = vpack.c.bf16 %v772, %v771
        %v774 = vld [vmem:[%s670] sm:$0xf]
        %v775 = vld [vmem:[%s670 + $0x4] sm:$0xf]
        %v776 = vld [vmem:[%s670 + $0x8] sm:$0xf]
        %v777 = vld [vmem:[%s670 + $0xc] sm:$0xf]
        %v782 = vunpack.c.l.b16 %v774
        %v783 = vunpack.c.l.b16 %v775
        %v784 = vunpack.c.l.b16 %v776
        %v785 = vunpack.c.l.b16 %v777
        %v786 = vpack.c.b16 %v783, %v782
        %v787 = vpack.c.b16 %v785, %v784
        %v791 = vsel %vm729, %v773, 0
        %793 = vmatprep.subr.bf16.mxu0 0
        %794 = vmatpush1.bf16.msra.mxu0 %v786
        %795 = vmatprep.subr.bf16.mxu0 0
        %796 = vmatpush1.bf16.msra.mxu0 %v787
        %797 = vmatprep.subr.bf16.mxu0 0
        %798 = vmatpush1.bf16.msra.mxu0 0
        %799 = vmatprep.subr.bf16.mxu0 0
        %800 = vmatpush1.bf16.msra.mxu0 0
        %801 = vmatprep.subr.bf16.mxu0 0
        %802 = vmatpush1.bf16.msra.mxu0 0
        %803 = vmatprep.subr.bf16.mxu0 0
        %804 = vmatpush1.bf16.msra.mxu0 0
        %805 = vmatprep.subr.bf16.mxu0 0
        %806 = vmatpush1.bf16.msra.mxu0 0
        %807 = vmatprep.subr.bf16.mxu0 0
        %808 = vmatpush1.bf16.msra.mxu0 0
        %809 = vmatprep.subr.bf16.mxu0 0
        %810 = vmatpush1.bf16.msra.mxu0 0
        %811 = vmatprep.subr.bf16.mxu0 0
        %812 = vmatpush1.bf16.msra.mxu0 0
        %813 = vmatprep.subr.bf16.mxu0 0
        %814 = vmatpush1.bf16.msra.mxu0 0
        %815 = vmatprep.subr.bf16.mxu0 0
        %816 = vmatpush1.bf16.msra.mxu0 0
        %817 = vmatprep.subr.bf16.mxu0 0
        %818 = vmatpush1.bf16.msra.mxu0 0
        %819 = vmatprep.subr.bf16.mxu0 0
        %820 = vmatpush1.bf16.msra.mxu0 0
        %821 = vmatprep.subr.bf16.mxu0 0
        %822 = vmatpush1.bf16.msra.mxu0 0
        %823 = vmatprep.subr.bf16.mxu0 0
        %824 = vmatpush1.bf16.msra.mxu0 0
        %825 = vmatprep.mubr.bf16.mxu0 0
        %826 = vmatmul.mubr.bf16.gmra.mrb[0].mxu0 %v791
        %v827 = vpop.f32.mrb[0].mxu0
        %v828 = vadd.f32 0.0, %v827
        %v829 = vpop.f32.mrb[0].mxu0
        %v830 = vpop.f32.mrb[0].mxu0
        %v831 = vadd.f32 0.0, %v830
        %v832 = vpop.f32.mrb[0].mxu0
        %833 = vdwg.mxu0
        %v834 = vpack.c.bf16 %v828, %v828
        %v835 = vpack.c.bf16 %v831, %v831
        %837 = vrot.lane.b32.xlu0 %v834, 96
        %v838 = vpop.permute.xlu0 %837
        %vm839 = vcmask 64512
        %v841 = vsel %vm839, %v834, 0
        %v844 = vsel %vm839, %v838, 0
        %846 = vmatprep.subr.bf16.mxu0 0
        %847 = vmatpush1.bf16.xpose.msra.mxu0 %v844
        %848 = vmatprep.subr.bf16.mxu0 0
        %849 = vmatpush1.bf16.xpose.msra.mxu0 0
        %850 = vmatprep.subr.bf16.mxu0 0
        %851 = vmatpush1.bf16.xpose.msra.mxu0 0
        %852 = vmatprep.subr.bf16.mxu0 0
        %853 = vmatpush1.bf16.xpose.msra.mxu0 0
        %854 = vmatprep.subr.bf16.mxu0 0
        %855 = vmatpush1.bf16.xpose.msra.mxu0 0
        %856 = vmatprep.subr.bf16.mxu0 0
        %857 = vmatpush1.bf16.xpose.msra.mxu0 0
        %858 = vmatprep.subr.bf16.mxu0 0
        %859 = vmatpush1.bf16.xpose.msra.mxu0 0
        %860 = vmatprep.subr.bf16.mxu0 0
        %861 = vmatpush1.bf16.xpose.msra.mxu0 0
        %862 = vmatprep.subr.bf16.mxu0 0
        %863 = vmatpush1.bf16.xpose.msra.mxu0 0
        %864 = vmatprep.subr.bf16.mxu0 0
        %865 = vmatpush1.bf16.xpose.msra.mxu0 0
        %866 = vmatprep.subr.bf16.mxu0 0
        %867 = vmatpush1.bf16.xpose.msra.mxu0 0
        %868 = vmatprep.subr.bf16.mxu0 0
        %869 = vmatpush1.bf16.xpose.msra.mxu0 0
        %870 = vmatprep.subr.bf16.mxu0 0
        %871 = vmatpush1.bf16.xpose.msra.mxu0 0
        %872 = vmatprep.subr.bf16.mxu0 0
        %873 = vmatpush1.bf16.xpose.msra.mxu0 0
        %874 = vmatprep.subr.bf16.mxu0 0
        %875 = vmatpush1.bf16.xpose.msra.mxu0 0
        %876 = vmatprep.subr.bf16.mxu0 0
        %877 = vmatpush1.bf16.xpose.msra.mxu0 0
        %878 = vmatprep.mubr.bf16.mxu0 0
        %879 = vmatmul.mubr.bf16.gmra.mrb[0].mxu0 %v841
        %v880 = vpop.f32.mrb[0].mxu0
        %v881 = vadd.f32 0.0, %v880
        %v882 = vpop.f32.mrb[0].mxu0
        %v883 = vpop.f32.mrb[0].mxu0
        %v884 = vpop.f32.mrb[0].mxu0
        %885 = vdwg.mxu0
        %887 = vrot.lane.b32.xlu0 %v835, 96
        %v888 = vpop.permute.xlu0 %887
        %v890 = vsel %vm839, %v835, 0
        %v893 = vsel %vm839, %v888, 0
        %895 = vmatprep.subr.bf16.mxu0 0
        %896 = vmatpush1.bf16.xpose.msra.mxu0 %v893
        %897 = vmatprep.subr.bf16.mxu0 0
        %898 = vmatpush1.bf16.xpose.msra.mxu0 0
        %899 = vmatprep.subr.bf16.mxu0 0
        %900 = vmatpush1.bf16.xpose.msra.mxu0 0
        %901 = vmatprep.subr.bf16.mxu0 0
        %902 = vmatpush1.bf16.xpose.msra.mxu0 0
        %903 = vmatprep.subr.bf16.mxu0 0
        %904 = vmatpush1.bf16.xpose.msra.mxu0 0
        %905 = vmatprep.subr.bf16.mxu0 0
        %906 = vmatpush1.bf16.xpose.msra.mxu0 0
        %907 = vmatprep.subr.bf16.mxu0 0
        %908 = vmatpush1.bf16.xpose.msra.mxu0 0
        %909 = vmatprep.subr.bf16.mxu0 0
        %910 = vmatpush1.bf16.xpose.msra.mxu0 0
        %911 = vmatprep.subr.bf16.mxu0 0
        %912 = vmatpush1.bf16.xpose.msra.mxu0 0
        %913 = vmatprep.subr.bf16.mxu0 0
        %914 = vmatpush1.bf16.xpose.msra.mxu0 0
        %915 = vmatprep.subr.bf16.mxu0 0
        %916 = vmatpush1.bf16.xpose.msra.mxu0 0
        %917 = vmatprep.subr.bf16.mxu0 0
        %918 = vmatpush1.bf16.xpose.msra.mxu0 0
        %919 = vmatprep.subr.bf16.mxu0 0
        %920 = vmatpush1.bf16.xpose.msra.mxu0 0
        %921 = vmatprep.subr.bf16.mxu0 0
        %922 = vmatpush1.bf16.xpose.msra.mxu0 0
        %923 = vmatprep.subr.bf16.mxu0 0
        %924 = vmatpush1.bf16.xpose.msra.mxu0 0
        %925 = vmatprep.subr.bf16.mxu0 0
        %926 = vmatpush1.bf16.xpose.msra.mxu0 0
        %927 = vmatprep.mubr.bf16.mxu0 0
        %928 = vmatmul.mubr.bf16.gmra.mrb[0].mxu0 %v890
        %v929 = vpop.f32.mrb[0].mxu0
        %v930 = vadd.f32 0.0, %v929
        %v931 = vpop.f32.mrb[0].mxu0
        %v932 = vpop.f32.mrb[0].mxu0
        %v933 = vpop.f32.mrb[0].mxu0
        %934 = vdwg.mxu0
        %v935 = vmul.f32 %v881, 0.35355338
        %v936 = vmul.f32 %v930, 0.35355338
        %v937 = vsel %vm839, %v935, -inf
        %938 = vmax.xlane.f32.xlu0 %v937
        %v939 = vpop.xlane.xlu0 %938
        %v940 = vsel %vm839, %v936, -inf
        %941 = vmax.xlane.f32.xlu0 %v940
        %v942 = vpop.xlane.xlu0 %941
        %v943 = vsub.f32 %v935, %v939
        %v944 = vsub.f32 %v936, %v942
        %v945 = vmul.f32 %v943, 1.442695
        %v946 = vpow.pop %v945
        %v947 = vmul.f32 %v944, 1.442695
        %v948 = vpow.pop %v947
        %v949 = vsel %vm839, %v946, 0.0
        %950 = vadd.xlane.f32.xlu0 %v949
        %v951 = vpop.xlane.xlu0 %950
        %v952 = vsel %vm839, %v948, 0.0
        %953 = vadd.xlane.f32.xlu0 %v952
        %v954 = vpop.xlane.xlu0 %953
        %v955 = vrcp.pop %v951
        %v956 = vrcp.pop %v954
        %v957 = vmul.f32 %v946, %v955
        %v958 = vmul.f32 %v948, %v956
        %v959 = vpack.c.bf16 %v957, %v957
        %v960 = vpack.c.bf16 %v958, %v958
        %961 = vrot.lane.b32.xlu0 %v834, 64
        %v962 = vpop.permute.xlu0 %961
        %v964 = vsel %vm839, %v959, 0
        %vm966 = vcmask 1043456
        %v968 = vsel %vm966, %v962, 0
        %970 = vmatprep.subr.bf16.mxu0 0
        %971 = vmatpush1.bf16.msra.mxu0 %v968
        %972 = vmatprep.subr.bf16.mxu0 0
        %973 = vmatpush1.bf16.msra.mxu0 0
        %974 = vmatprep.subr.bf16.mxu0 0
        %975 = vmatpush1.bf16.msra.mxu0 0
        %976 = vmatprep.subr.bf16.mxu0 0
        %977 = vmatpush1.bf16.msra.mxu0 0
        %978 = vmatprep.subr.bf16.mxu0 0
        %979 = vmatpush1.bf16.msra.mxu0 0
        %980 = vmatprep.subr.bf16.mxu0 0
        %981 = vmatpush1.bf16.msra.mxu0 0
        %982 = vmatprep.subr.bf16.mxu0 0
        %983 = vmatpush1.bf16.msra.mxu0 0
        %984 = vmatprep.subr.bf16.mxu0 0
        %985 = vmatpush1.bf16.msra.mxu0 0
        %986 = vmatprep.subr.bf16.mxu0 0
        %987 = vmatpush1.bf16.msra.mxu0 0
        %988 = vmatprep.subr.bf16.mxu0 0
        %989 = vmatpush1.bf16.msra.mxu0 0
        %990 = vmatprep.subr.bf16.mxu0 0
        %991 = vmatpush1.bf16.msra.mxu0 0
        %992 = vmatprep.subr.bf16.mxu0 0
        %993 = vmatpush1.bf16.msra.mxu0 0
        %994 = vmatprep.subr.bf16.mxu0 0
        %995 = vmatpush1.bf16.msra.mxu0 0
        %996 = vmatprep.subr.bf16.mxu0 0
        %997 = vmatpush1.bf16.msra.mxu0 0
        %998 = vmatprep.subr.bf16.mxu0 0
        %999 = vmatpush1.bf16.msra.mxu0 0
        %1000 = vmatprep.subr.bf16.mxu0 0
        %1001 = vmatpush1.bf16.msra.mxu0 0
        %1002 = vmatprep.mubr.bf16.mxu0 0
        %1003 = vmatmul.mubr.bf16.gmra.mrb[0].mxu0 %v964
        %v1004 = vpop.f32.mrb[0].mxu0
        %v1005 = vadd.f32 0.0, %v1004
        %v1006 = vpop.f32.mrb[0].mxu0
        %v1007 = vpop.f32.mrb[0].mxu0
        %v1008 = vpop.f32.mrb[0].mxu0
        %1009 = vdwg.mxu0
        %1010 = vrot.lane.b32.xlu0 %v835, 64
        %v1011 = vpop.permute.xlu0 %1010
        %v1013 = vsel %vm839, %v960, 0
        %v1016 = vsel %vm966, %v1011, 0
        %1018 = vmatprep.subr.bf16.mxu0 0
        %1019 = vmatpush1.bf16.msra.mxu0 %v1016
        %1020 = vmatprep.subr.bf16.mxu0 0
        %1021 = vmatpush1.bf16.msra.mxu0 0
        %1022 = vmatprep.subr.bf16.mxu0 0
        %1023 = vmatpush1.bf16.msra.mxu0 0
        %1024 = vmatprep.subr.bf16.mxu0 0
        %1025 = vmatpush1.bf16.msra.mxu0 0
        %1026 = vmatprep.subr.bf16.mxu0 0
        %1027 = vmatpush1.bf16.msra.mxu0 0
        %1028 = vmatprep.subr.bf16.mxu0 0
        %1029 = vmatpush1.bf16.msra.mxu0 0
        %1030 = vmatprep.subr.bf16.mxu0 0
        %1031 = vmatpush1.bf16.msra.mxu0 0
        %1032 = vmatprep.subr.bf16.mxu0 0
        %1033 = vmatpush1.bf16.msra.mxu0 0
        %1034 = vmatprep.subr.bf16.mxu0 0
        %1035 = vmatpush1.bf16.msra.mxu0 0
        %1036 = vmatprep.subr.bf16.mxu0 0
        %1037 = vmatpush1.bf16.msra.mxu0 0
        %1038 = vmatprep.subr.bf16.mxu0 0
        %1039 = vmatpush1.bf16.msra.mxu0 0
        %1040 = vmatprep.subr.bf16.mxu0 0
        %1041 = vmatpush1.bf16.msra.mxu0 0
        %1042 = vmatprep.subr.bf16.mxu0 0
        %1043 = vmatpush1.bf16.msra.mxu0 0
        %1044 = vmatprep.subr.bf16.mxu0 0
        %1045 = vmatpush1.bf16.msra.mxu0 0
        %1046 = vmatprep.subr.bf16.mxu0 0
        %1047 = vmatpush1.bf16.msra.mxu0 0
        %1048 = vmatprep.subr.bf16.mxu0 0
        %1049 = vmatpush1.bf16.msra.mxu0 0
        %1050 = vmatprep.mubr.bf16.mxu0 0
        %1051 = vmatmul.mubr.bf16.gmra.mrb[0].mxu0 %v1013
        %v1052 = vpop.f32.mrb[0].mxu0
        %v1053 = vadd.f32 0.0, %v1052
        %v1054 = vpop.f32.mrb[0].mxu0
        %v1055 = vpop.f32.mrb[0].mxu0
        %v1056 = vpop.f32.mrb[0].mxu0
        %1057 = vdwg.mxu0
        %1058 = vrot.lane.b32.xlu0 %v834, 120
        %v1059 = vpop.permute.xlu0 %1058
        %1060 = vrot.lane.b32.xlu0 %v834, 88
        %v1061 = vpop.permute.xlu0 %1060
        %v1063 = vsel %vm839, %v1059, 0
        %v1066 = vsel %vm839, %v1061, 0
        %1068 = vmatprep.subr.bf16.mxu0 0
        %1069 = vmatpush1.bf16.xpose.msra.mxu0 %v1066
        %1070 = vmatprep.subr.bf16.mxu0 0
        %1071 = vmatpush1.bf16.xpose.msra.mxu0 0
        %1072 = vmatprep.subr.bf16.mxu0 0
        %1073 = vmatpush1.bf16.xpose.msra.mxu0 0
        %1074 = vmatprep.subr.bf16.mxu0 0
        %1075 = vmatpush1.bf16.xpose.msra.mxu0 0
        %1076 = vmatprep.subr.bf16.mxu0 0
        %1077 = vmatpush1.bf16.xpose.msra.mxu0 0
        %1078 = vmatprep.subr.bf16.mxu0 0
        %1079 = vmatpush1.bf16.xpose.msra.mxu0 0
        %1080 = vmatprep.subr.bf16.mxu0 0
        %1081 = vmatpush1.bf16.xpose.msra.mxu0 0
        %1082 = vmatprep.subr.bf16.mxu0 0
        %1083 = vmatpush1.bf16.xpose.msra.mxu0 0
        %1084 = vmatprep.subr.bf16.mxu0 0
        %1085 = vmatpush1.bf16.xpose.msra.mxu0 0
        %1086 = vmatprep.subr.bf16.mxu0 0
        %1087 = vmatpush1.bf16.xpose.msra.mxu0 0
        %1088 = vmatprep.subr.bf16.mxu0 0
        %1089 = vmatpush1.bf16.xpose.msra.mxu0 0
        %1090 = vmatprep.subr.bf16.mxu0 0
        %1091 = vmatpush1.bf16.xpose.msra.mxu0 0
        %1092 = vmatprep.subr.bf16.mxu0 0
        %1093 = vmatpush1.bf16.xpose.msra.mxu0 0
        %1094 = vmatprep.subr.bf16.mxu0 0
        %1095 = vmatpush1.bf16.xpose.msra.mxu0 0
        %1096 = vmatprep.subr.bf16.mxu0 0
        %1097 = vmatpush1.bf16.xpose.msra.mxu0 0
        %1098 = vmatprep.subr.bf16.mxu0 0
        %1099 = vmatpush1.bf16.xpose.msra.mxu0 0
        %1100 = vmatprep.mubr.bf16.mxu0 0
        %1101 = vmatmul.mubr.bf16.gmra.mrb[0].mxu0 %v1063
        %v1102 = vpop.f32.mrb[0].mxu0
        %v1103 = vadd.f32 0.0, %v1102
        %v1104 = vpop.f32.mrb[0].mxu0
        %v1105 = vpop.f32.mrb[0].mxu0
        %v1106 = vpop.f32.mrb[0].mxu0
        %1107 = vdwg.mxu0
        %1108 = vrot.lane.b32.xlu0 %v835, 120
        %v1109 = vpop.permute.xlu0 %1108
        %1110 = vrot.lane.b32.xlu0 %v835, 88
        %v1111 = vpop.permute.xlu0 %1110
        %v1113 = vsel %vm839, %v1109, 0
        %v1116 = vsel %vm839, %v1111, 0
        %1118 = vmatprep.subr.bf16.mxu0 0
        %1119 = vmatpush1.bf16.xpose.msra.mxu0 %v1116
        %1120 = vmatprep.subr.bf16.mxu0 0
        %1121 = vmatpush1.bf16.xpose.msra.mxu0 0
        %1122 = vmatprep.subr.bf16.mxu0 0
        %1123 = vmatpush1.bf16.xpose.msra.mxu0 0
        %1124 = vmatprep.subr.bf16.mxu0 0
        %1125 = vmatpush1.bf16.xpose.msra.mxu0 0
        %1126 = vmatprep.subr.bf16.mxu0 0
        %1127 = vmatpush1.bf16.xpose.msra.mxu0 0
        %1128 = vmatprep.subr.bf16.mxu0 0
        %1129 = vmatpush1.bf16.xpose.msra.mxu0 0
        %1130 = vmatprep.subr.bf16.mxu0 0
        %1131 = vmatpush1.bf16.xpose.msra.mxu0 0
        %1132 = vmatprep.subr.bf16.mxu0 0
        %1133 = vmatpush1.bf16.xpose.msra.mxu0 0
        %1134 = vmatprep.subr.bf16.mxu0 0
        %1135 = vmatpush1.bf16.xpose.msra.mxu0 0
        %1136 = vmatprep.subr.bf16.mxu0 0
        %1137 = vmatpush1.bf16.xpose.msra.mxu0 0
        %1138 = vmatprep.subr.bf16.mxu0 0
        %1139 = vmatpush1.bf16.xpose.msra.mxu0 0
        %1140 = vmatprep.subr.bf16.mxu0 0
        %1141 = vmatpush1.bf16.xpose.msra.mxu0 0
        %1142 = vmatprep.subr.bf16.mxu0 0
        %1143 = vmatpush1.bf16.xpose.msra.mxu0 0
        %1144 = vmatprep.subr.bf16.mxu0 0
        %1145 = vmatpush1.bf16.xpose.msra.mxu0 0
        %1146 = vmatprep.subr.bf16.mxu0 0
        %1147 = vmatpush1.bf16.xpose.msra.mxu0 0
        %1148 = vmatprep.subr.bf16.mxu0 0
        %1149 = vmatpush1.bf16.xpose.msra.mxu0 0
        %1150 = vmatprep.mubr.bf16.mxu0 0
        %1151 = vmatmul.mubr.bf16.gmra.mrb[0].mxu0 %v1113
        %v1152 = vpop.f32.mrb[0].mxu0
        %v1153 = vadd.f32 0.0, %v1152
        %v1154 = vpop.f32.mrb[0].mxu0
        %v1155 = vpop.f32.mrb[0].mxu0
        %v1156 = vpop.f32.mrb[0].mxu0
        %1157 = vdwg.mxu0
        %v1158 = vmul.f32 %v1103, 0.35355338
        %v1159 = vmul.f32 %v1153, 0.35355338
        %v1160 = vsel %vm839, %v1158, -inf
        %1161 = vmax.xlane.f32.xlu0 %v1160
        %v1162 = vpop.xlane.xlu0 %1161
        %v1163 = vsel %vm839, %v1159, -inf
        %1164 = vmax.xlane.f32.xlu0 %v1163
        %v1165 = vpop.xlane.xlu0 %1164
        %v1166 = vsub.f32 %v1158, %v1162
        %v1167 = vsub.f32 %v1159, %v1165
        %v1168 = vmul.f32 %v1166, 1.442695
        %v1169 = vpow.pop %v1168
        %v1170 = vmul.f32 %v1167, 1.442695
        %v1171 = vpow.pop %v1170
        %v1172 = vsel %vm839, %v1169, 0.0
        %1173 = vadd.xlane.f32.xlu0 %v1172
        %v1174 = vpop.xlane.xlu0 %1173
        %v1175 = vsel %vm839, %v1171, 0.0
        %1176 = vadd.xlane.f32.xlu0 %v1175
        %v1177 = vpop.xlane.xlu0 %1176
        %v1178 = vrcp.pop %v1174
        %v1179 = vrcp.pop %v1177
        %v1180 = vmul.f32 %v1169, %v1178
        %v1181 = vmul.f32 %v1171, %v1179
        %v1182 = vpack.c.bf16 %v1180, %v1180
        %v1183 = vpack.c.bf16 %v1181, %v1181
        %1184 = vrot.lane.b32.xlu0 %v834, 56
        %v1185 = vpop.permute.xlu0 %1184
        %v1187 = vsel %vm839, %v1182, 0
        %v1190 = vsel %vm966, %v1185, 0
        %1192 = vmatprep.subr.bf16.mxu0 0
        %1193 = vmatpush1.bf16.msra.mxu0 %v1190
        %1194 = vmatprep.subr.bf16.mxu0 0
        %1195 = vmatpush1.bf16.msra.mxu0 0
        %1196 = vmatprep.subr.bf16.mxu0 0
        %1197 = vmatpush1.bf16.msra.mxu0 0
        %1198 = vmatprep.subr.bf16.mxu0 0
        %1199 = vmatpush1.bf16.msra.mxu0 0
        %1200 = vmatprep.subr.bf16.mxu0 0
        %1201 = vmatpush1.bf16.msra.mxu0 0
        %1202 = vmatprep.subr.bf16.mxu0 0
        %1203 = vmatpush1.bf16.msra.mxu0 0
        %1204 = vmatprep.subr.bf16.mxu0 0
        %1205 = vmatpush1.bf16.msra.mxu0 0
        %1206 = vmatprep.subr.bf16.mxu0 0
        %1207 = vmatpush1.bf16.msra.mxu0 0
        %1208 = vmatprep.subr.bf16.mxu0 0
        %1209 = vmatpush1.bf16.msra.mxu0 0
        %1210 = vmatprep.subr.bf16.mxu0 0
        %1211 = vmatpush1.bf16.msra.mxu0 0
        %1212 = vmatprep.subr.bf16.mxu0 0
        %1213 = vmatpush1.bf16.msra.mxu0 0
        %1214 = vmatprep.subr.bf16.mxu0 0
        %1215 = vmatpush1.bf16.msra.mxu0 0
        %1216 = vmatprep.subr.bf16.mxu0 0
        %1217 = vmatpush1.bf16.msra.mxu0 0
        %1218 = vmatprep.subr.bf16.mxu0 0
        %1219 = vmatpush1.bf16.msra.mxu0 0
        %1220 = vmatprep.subr.bf16.mxu0 0
        %1221 = vmatpush1.bf16.msra.mxu0 0
        %1222 = vmatprep.subr.bf16.mxu0 0
        %1223 = vmatpush1.bf16.msra.mxu0 0
        %1224 = vmatprep.mubr.bf16.mxu0 0
        %1225 = vmatmul.mubr.bf16.gmra.mrb[0].mxu0 %v1187
        %v1226 = vpop.f32.mrb[0].mxu0
        %v1227 = vadd.f32 0.0, %v1226
        %v1228 = vpop.f32.mrb[0].mxu0
        %v1229 = vpop.f32.mrb[0].mxu0
        %v1230 = vpop.f32.mrb[0].mxu0
        %1231 = vdwg.mxu0
        %1232 = vrot.lane.b32.xlu0 %v835, 56
        %v1233 = vpop.permute.xlu0 %1232
        %v1235 = vsel %vm839, %v1183, 0
        %v1238 = vsel %vm966, %v1233, 0
        %1240 = vmatprep.subr.bf16.mxu0 0
        %1241 = vmatpush1.bf16.msra.mxu0 %v1238
        %1242 = vmatprep.subr.bf16.mxu0 0
        %1243 = vmatpush1.bf16.msra.mxu0 0
        %1244 = vmatprep.subr.bf16.mxu0 0
        %1245 = vmatpush1.bf16.msra.mxu0 0
        %1246 = vmatprep.subr.bf16.mxu0 0
        %1247 = vmatpush1.bf16.msra.mxu0 0
        %1248 = vmatprep.subr.bf16.mxu0 0
        %1249 = vmatpush1.bf16.msra.mxu0 0
        %1250 = vmatprep.subr.bf16.mxu0 0
        %1251 = vmatpush1.bf16.msra.mxu0 0
        %1252 = vmatprep.subr.bf16.mxu0 0
        %1253 = vmatpush1.bf16.msra.mxu0 0
        %1254 = vmatprep.subr.bf16.mxu0 0
        %1255 = vmatpush1.bf16.msra.mxu0 0
        %1256 = vmatprep.subr.bf16.mxu0 0
        %1257 = vmatpush1.bf16.msra.mxu0 0
        %1258 = vmatprep.subr.bf16.mxu0 0
        %1259 = vmatpush1.bf16.msra.mxu0 0
        %1260 = vmatprep.subr.bf16.mxu0 0
        %1261 = vmatpush1.bf16.msra.mxu0 0
        %1262 = vmatprep.subr.bf16.mxu0 0
        %1263 = vmatpush1.bf16.msra.mxu0 0
        %1264 = vmatprep.subr.bf16.mxu0 0
        %1265 = vmatpush1.bf16.msra.mxu0 0
        %1266 = vmatprep.subr.bf16.mxu0 0
        %1267 = vmatpush1.bf16.msra.mxu0 0
        %1268 = vmatprep.subr.bf16.mxu0 0
        %1269 = vmatpush1.bf16.msra.mxu0 0
        %1270 = vmatprep.subr.bf16.mxu0 0
        %1271 = vmatpush1.bf16.msra.mxu0 0
        %1272 = vmatprep.mubr.bf16.mxu0 0
        %1273 = vmatmul.mubr.bf16.gmra.mrb[0].mxu0 %v1235
        %v1274 = vpop.f32.mrb[0].mxu0
        %v1275 = vadd.f32 0.0, %v1274
        %v1276 = vpop.f32.mrb[0].mxu0
        %v1277 = vpop.f32.mrb[0].mxu0
        %v1278 = vpop.f32.mrb[0].mxu0
        %1279 = vdwg.mxu0
        %1280 = vrot.lane.b32.xlu0 %v834, 112
        %v1281 = vpop.permute.xlu0 %1280
        %1282 = vrot.lane.b32.xlu0 %v834, 80
        %v1283 = vpop.permute.xlu0 %1282
        %v1285 = vsel %vm839, %v1281, 0
        %v1288 = vsel %vm839, %v1283, 0
        %1290 = vmatprep.subr.bf16.mxu0 0
        %1291 = vmatpush1.bf16.xpose.msra.mxu0 %v1288
        %1292 = vmatprep.subr.bf16.mxu0 0
        %1293 = vmatpush1.bf16.xpose.msra.mxu0 0
        %1294 = vmatprep.subr.bf16.mxu0 0
        %1295 = vmatpush1.bf16.xpose.msra.mxu0 0
        %1296 = vmatprep.subr.bf16.mxu0 0
        %1297 = vmatpush1.bf16.xpose.msra.mxu0 0
        %1298 = vmatprep.subr.bf16.mxu0 0
        %1299 = vmatpush1.bf16.xpose.msra.mxu0 0
        %1300 = vmatprep.subr.bf16.mxu0 0
        %1301 = vmatpush1.bf16.xpose.msra.mxu0 0
        %1302 = vmatprep.subr.bf16.mxu0 0
        %1303 = vmatpush1.bf16.xpose.msra.mxu0 0
        %1304 = vmatprep.subr.bf16.mxu0 0
        %1305 = vmatpush1.bf16.xpose.msra.mxu0 0
        %1306 = vmatprep.subr.bf16.mxu0 0
        %1307 = vmatpush1.bf16.xpose.msra.mxu0 0
        %1308 = vmatprep.subr.bf16.mxu0 0
        %1309 = vmatpush1.bf16.xpose.msra.mxu0 0
        %1310 = vmatprep.subr.bf16.mxu0 0
        %1311 = vmatpush1.bf16.xpose.msra.mxu0 0
        %1312 = vmatprep.subr.bf16.mxu0 0
        %1313 = vmatpush1.bf16.xpose.msra.mxu0 0
        %1314 = vmatprep.subr.bf16.mxu0 0
        %1315 = vmatpush1.bf16.xpose.msra.mxu0 0
        %1316 = vmatprep.subr.bf16.mxu0 0
        %1317 = vmatpush1.bf16.xpose.msra.mxu0 0
        %1318 = vmatprep.subr.bf16.mxu0 0
        %1319 = vmatpush1.bf16.xpose.msra.mxu0 0
        %1320 = vmatprep.subr.bf16.mxu0 0
        %1321 = vmatpush1.bf16.xpose.msra.mxu0 0
        %1322 = vmatprep.mubr.bf16.mxu0 0
        %1323 = vmatmul.mubr.bf16.gmra.mrb[0].mxu0 %v1285
        %v1324 = vpop.f32.mrb[0].mxu0
        %v1325 = vadd.f32 0.0, %v1324
        %v1326 = vpop.f32.mrb[0].mxu0
        %v1327 = vpop.f32.mrb[0].mxu0
        %v1328 = vpop.f32.mrb[0].mxu0
        %1329 = vdwg.mxu0
        %1330 = vrot.lane.b32.xlu0 %v835, 112
        %v1331 = vpop.permute.xlu0 %1330
        %1332 = vrot.lane.b32.xlu0 %v835, 80
        %v1333 = vpop.permute.xlu0 %1332
        %v1335 = vsel %vm839, %v1331, 0
        %v1338 = vsel %vm839, %v1333, 0
        %1340 = vmatprep.subr.bf16.mxu0 0
        %1341 = vmatpush1.bf16.xpose.msra.mxu0 %v1338
        %1342 = vmatprep.subr.bf16.mxu0 0
        %1343 = vmatpush1.bf16.xpose.msra.mxu0 0
        %1344 = vmatprep.subr.bf16.mxu0 0
        %1345 = vmatpush1.bf16.xpose.msra.mxu0 0
        %1346 = vmatprep.subr.bf16.mxu0 0
        %1347 = vmatpush1.bf16.xpose.msra.mxu0 0
        %1348 = vmatprep.subr.bf16.mxu0 0
        %1349 = vmatpush1.bf16.xpose.msra.mxu0 0
        %1350 = vmatprep.subr.bf16.mxu0 0
        %1351 = vmatpush1.bf16.xpose.msra.mxu0 0
        %1352 = vmatprep.subr.bf16.mxu0 0
        %1353 = vmatpush1.bf16.xpose.msra.mxu0 0
        %1354 = vmatprep.subr.bf16.mxu0 0
        %1355 = vmatpush1.bf16.xpose.msra.mxu0 0
        %1356 = vmatprep.subr.bf16.mxu0 0
        %1357 = vmatpush1.bf16.xpose.msra.mxu0 0
        %1358 = vmatprep.subr.bf16.mxu0 0
        %1359 = vmatpush1.bf16.xpose.msra.mxu0 0
        %1360 = vmatprep.subr.bf16.mxu0 0
        %1361 = vmatpush1.bf16.xpose.msra.mxu0 0
        %1362 = vmatprep.subr.bf16.mxu0 0
        %1363 = vmatpush1.bf16.xpose.msra.mxu0 0
        %1364 = vmatprep.subr.bf16.mxu0 0
        %1365 = vmatpush1.bf16.xpose.msra.mxu0 0
        %1366 = vmatprep.subr.bf16.mxu0 0
        %1367 = vmatpush1.bf16.xpose.msra.mxu0 0
        %1368 = vmatprep.subr.bf16.mxu0 0
        %1369 = vmatpush1.bf16.xpose.msra.mxu0 0
        %1370 = vmatprep.subr.bf16.mxu0 0
        %1371 = vmatpush1.bf16.xpose.msra.mxu0 0
        %1372 = vmatprep.mubr.bf16.mxu0 0
        %1373 = vmatmul.mubr.bf16.gmra.mrb[0].mxu0 %v1335
        %v1374 = vpop.f32.mrb[0].mxu0
        %v1375 = vadd.f32 0.0, %v1374
        %v1376 = vpop.f32.mrb[0].mxu0
        %v1377 = vpop.f32.mrb[0].mxu0
        %v1378 = vpop.f32.mrb[0].mxu0
        %1379 = vdwg.mxu0
        %v1380 = vmul.f32 %v1325, 0.35355338
        %v1381 = vmul.f32 %v1375, 0.35355338
        %v1382 = vsel %vm839, %v1380, -inf
        %1383 = vmax.xlane.f32.xlu0 %v1382
        %v1384 = vpop.xlane.xlu0 %1383
        %v1385 = vsel %vm839, %v1381, -inf
        %1386 = vmax.xlane.f32.xlu0 %v1385
        %v1387 = vpop.xlane.xlu0 %1386
        %v1388 = vsub.f32 %v1380, %v1384
        %v1389 = vsub.f32 %v1381, %v1387
        %v1390 = vmul.f32 %v1388, 1.442695
        %v1391 = vpow.pop %v1390
        %v1392 = vmul.f32 %v1389, 1.442695
        %v1393 = vpow.pop %v1392
        %v1394 = vsel %vm839, %v1391, 0.0
        %1395 = vadd.xlane.f32.xlu0 %v1394
        %v1396 = vpop.xlane.xlu0 %1395
        %v1397 = vsel %vm839, %v1393, 0.0
        %1398 = vadd.xlane.f32.xlu0 %v1397
        %v1399 = vpop.xlane.xlu0 %1398
        %v1400 = vrcp.pop %v1396
        %v1401 = vrcp.pop %v1399
        %v1402 = vmul.f32 %v1391, %v1400
        %v1403 = vmul.f32 %v1393, %v1401
        %v1404 = vpack.c.bf16 %v1402, %v1402
        %v1405 = vpack.c.bf16 %v1403, %v1403
        %1406 = vrot.lane.b32.xlu0 %v834, 48
        %v1407 = vpop.permute.xlu0 %1406
        %v1409 = vsel %vm839, %v1404, 0
        %v1412 = vsel %vm966, %v1407, 0
        %1414 = vmatprep.subr.bf16.mxu0 0
        %1415 = vmatpush1.bf16.msra.mxu0 %v1412
        %1416 = vmatprep.subr.bf16.mxu0 0
        %1417 = vmatpush1.bf16.msra.mxu0 0
        %1418 = vmatprep.subr.bf16.mxu0 0
        %1419 = vmatpush1.bf16.msra.mxu0 0
        %1420 = vmatprep.subr.bf16.mxu0 0
        %1421 = vmatpush1.bf16.msra.mxu0 0
        %1422 = vmatprep.subr.bf16.mxu0 0
        %1423 = vmatpush1.bf16.msra.mxu0 0
        %1424 = vmatprep.subr.bf16.mxu0 0
        %1425 = vmatpush1.bf16.msra.mxu0 0
        %1426 = vmatprep.subr.bf16.mxu0 0
        %1427 = vmatpush1.bf16.msra.mxu0 0
        %1428 = vmatprep.subr.bf16.mxu0 0
        %1429 = vmatpush1.bf16.msra.mxu0 0
        %1430 = vmatprep.subr.bf16.mxu0 0
        %1431 = vmatpush1.bf16.msra.mxu0 0
        %1432 = vmatprep.subr.bf16.mxu0 0
        %1433 = vmatpush1.bf16.msra.mxu0 0
        %1434 = vmatprep.subr.bf16.mxu0 0
        %1435 = vmatpush1.bf16.msra.mxu0 0
        %1436 = vmatprep.subr.bf16.mxu0 0
        %1437 = vmatpush1.bf16.msra.mxu0 0
        %1438 = vmatprep.subr.bf16.mxu0 0
        %1439 = vmatpush1.bf16.msra.mxu0 0
        %1440 = vmatprep.subr.bf16.mxu0 0
        %1441 = vmatpush1.bf16.msra.mxu0 0
        %1442 = vmatprep.subr.bf16.mxu0 0
        %1443 = vmatpush1.bf16.msra.mxu0 0
        %1444 = vmatprep.subr.bf16.mxu0 0
        %1445 = vmatpush1.bf16.msra.mxu0 0
        %1446 = vmatprep.mubr.bf16.mxu0 0
        %1447 = vmatmul.mubr.bf16.gmra.mrb[0].mxu0 %v1409
        %v1448 = vpop.f32.mrb[0].mxu0
        %v1449 = vadd.f32 0.0, %v1448
        %v1450 = vpop.f32.mrb[0].mxu0
        %v1451 = vpop.f32.mrb[0].mxu0
        %v1452 = vpop.f32.mrb[0].mxu0
        %1453 = vdwg.mxu0
        %1454 = vrot.lane.b32.xlu0 %v835, 48
        %v1455 = vpop.permute.xlu0 %1454
        %v1457 = vsel %vm839, %v1405, 0
        %v1460 = vsel %vm966, %v1455, 0
        %1462 = vmatprep.subr.bf16.mxu0 0
        %1463 = vmatpush1.bf16.msra.mxu0 %v1460
        %1464 = vmatprep.subr.bf16.mxu0 0
        %1465 = vmatpush1.bf16.msra.mxu0 0
        %1466 = vmatprep.subr.bf16.mxu0 0
        %1467 = vmatpush1.bf16.msra.mxu0 0
        %1468 = vmatprep.subr.bf16.mxu0 0
        %1469 = vmatpush1.bf16.msra.mxu0 0
        %1470 = vmatprep.subr.bf16.mxu0 0
        %1471 = vmatpush1.bf16.msra.mxu0 0
        %1472 = vmatprep.subr.bf16.mxu0 0
        %1473 = vmatpush1.bf16.msra.mxu0 0
        %1474 = vmatprep.subr.bf16.mxu0 0
        %1475 = vmatpush1.bf16.msra.mxu0 0
        %1476 = vmatprep.subr.bf16.mxu0 0
        %1477 = vmatpush1.bf16.msra.mxu0 0
        %1478 = vmatprep.subr.bf16.mxu0 0
        %1479 = vmatpush1.bf16.msra.mxu0 0
        %1480 = vmatprep.subr.bf16.mxu0 0
        %1481 = vmatpush1.bf16.msra.mxu0 0
        %1482 = vmatprep.subr.bf16.mxu0 0
        %1483 = vmatpush1.bf16.msra.mxu0 0
        %1484 = vmatprep.subr.bf16.mxu0 0
        %1485 = vmatpush1.bf16.msra.mxu0 0
        %1486 = vmatprep.subr.bf16.mxu0 0
        %1487 = vmatpush1.bf16.msra.mxu0 0
        %1488 = vmatprep.subr.bf16.mxu0 0
        %1489 = vmatpush1.bf16.msra.mxu0 0
        %1490 = vmatprep.subr.bf16.mxu0 0
        %1491 = vmatpush1.bf16.msra.mxu0 0
        %1492 = vmatprep.subr.bf16.mxu0 0
        %1493 = vmatpush1.bf16.msra.mxu0 0
        %1494 = vmatprep.mubr.bf16.mxu0 0
        %1495 = vmatmul.mubr.bf16.gmra.mrb[0].mxu0 %v1457
        %v1496 = vpop.f32.mrb[0].mxu0
        %v1497 = vadd.f32 0.0, %v1496
        %v1498 = vpop.f32.mrb[0].mxu0
        %v1499 = vpop.f32.mrb[0].mxu0
        %v1500 = vpop.f32.mrb[0].mxu0
        %1501 = vdwg.mxu0
        %1502 = vrot.lane.b32.xlu0 %v834, 104
        %v1503 = vpop.permute.xlu0 %1502
        %1504 = vrot.lane.b32.xlu0 %v834, 72
        %v1505 = vpop.permute.xlu0 %1504
        %v1507 = vsel %vm839, %v1503, 0
        %v1510 = vsel %vm839, %v1505, 0
        %1512 = vmatprep.subr.bf16.mxu0 0
        %1513 = vmatpush1.bf16.xpose.msra.mxu0 %v1510
        %1514 = vmatprep.subr.bf16.mxu0 0
        %1515 = vmatpush1.bf16.xpose.msra.mxu0 0
        %1516 = vmatprep.subr.bf16.mxu0 0
        %1517 = vmatpush1.bf16.xpose.msra.mxu0 0
        %1518 = vmatprep.subr.bf16.mxu0 0
        %1519 = vmatpush1.bf16.xpose.msra.mxu0 0
        %1520 = vmatprep.subr.bf16.mxu0 0
        %1521 = vmatpush1.bf16.xpose.msra.mxu0 0
        %1522 = vmatprep.subr.bf16.mxu0 0
        %1523 = vmatpush1.bf16.xpose.msra.mxu0 0
        %1524 = vmatprep.subr.bf16.mxu0 0
        %1525 = vmatpush1.bf16.xpose.msra.mxu0 0
        %1526 = vmatprep.subr.bf16.mxu0 0
        %1527 = vmatpush1.bf16.xpose.msra.mxu0 0
        %1528 = vmatprep.subr.bf16.mxu0 0
        %1529 = vmatpush1.bf16.xpose.msra.mxu0 0
        %1530 = vmatprep.subr.bf16.mxu0 0
        %1531 = vmatpush1.bf16.xpose.msra.mxu0 0
        %1532 = vmatprep.subr.bf16.mxu0 0
        %1533 = vmatpush1.bf16.xpose.msra.mxu0 0
        %1534 = vmatprep.subr.bf16.mxu0 0
        %1535 = vmatpush1.bf16.xpose.msra.mxu0 0
        %1536 = vmatprep.subr.bf16.mxu0 0
        %1537 = vmatpush1.bf16.xpose.msra.mxu0 0
        %1538 = vmatprep.subr.bf16.mxu0 0
        %1539 = vmatpush1.bf16.xpose.msra.mxu0 0
        %1540 = vmatprep.subr.bf16.mxu0 0
        %1541 = vmatpush1.bf16.xpose.msra.mxu0 0
        %1542 = vmatprep.subr.bf16.mxu0 0
        %1543 = vmatpush1.bf16.xpose.msra.mxu0 0
        %1544 = vmatprep.mubr.bf16.mxu0 0
        %1545 = vmatmul.mubr.bf16.gmra.mrb[0].mxu0 %v1507
        %v1546 = vpop.f32.mrb[0].mxu0
        %v1547 = vadd.f32 0.0, %v1546
        %v1548 = vpop.f32.mrb[0].mxu0
        %v1549 = vpop.f32.mrb[0].mxu0
        %v1550 = vpop.f32.mrb[0].mxu0
        %1551 = vdwg.mxu0
        %1552 = vrot.lane.b32.xlu0 %v835, 104
        %v1553 = vpop.permute.xlu0 %1552
        %1554 = vrot.lane.b32.xlu0 %v835, 72
        %v1555 = vpop.permute.xlu0 %1554
        %v1557 = vsel %vm839, %v1553, 0
        %v1560 = vsel %vm839, %v1555, 0
        %1562 = vmatprep.subr.bf16.mxu0 0
        %1563 = vmatpush1.bf16.xpose.msra.mxu0 %v1560
        %1564 = vmatprep.subr.bf16.mxu0 0
        %1565 = vmatpush1.bf16.xpose.msra.mxu0 0
        %1566 = vmatprep.subr.bf16.mxu0 0
        %1567 = vmatpush1.bf16.xpose.msra.mxu0 0
        %1568 = vmatprep.subr.bf16.mxu0 0
        %1569 = vmatpush1.bf16.xpose.msra.mxu0 0
        %1570 = vmatprep.subr.bf16.mxu0 0
        %1571 = vmatpush1.bf16.xpose.msra.mxu0 0
        %1572 = vmatprep.subr.bf16.mxu0 0
        %1573 = vmatpush1.bf16.xpose.msra.mxu0 0
        %1574 = vmatprep.subr.bf16.mxu0 0
        %1575 = vmatpush1.bf16.xpose.msra.mxu0 0
        %1576 = vmatprep.subr.bf16.mxu0 0
        %1577 = vmatpush1.bf16.xpose.msra.mxu0 0
        %1578 = vmatprep.subr.bf16.mxu0 0
        %1579 = vmatpush1.bf16.xpose.msra.mxu0 0
        %1580 = vmatprep.subr.bf16.mxu0 0
        %1581 = vmatpush1.bf16.xpose.msra.mxu0 0
        %1582 = vmatprep.subr.bf16.mxu0 0
        %1583 = vmatpush1.bf16.xpose.msra.mxu0 0
        %1584 = vmatprep.subr.bf16.mxu0 0
        %1585 = vmatpush1.bf16.xpose.msra.mxu0 0
        %1586 = vmatprep.subr.bf16.mxu0 0
        %1587 = vmatpush1.bf16.xpose.msra.mxu0 0
        %1588 = vmatprep.subr.bf16.mxu0 0
        %1589 = vmatpush1.bf16.xpose.msra.mxu0 0
        %1590 = vmatprep.subr.bf16.mxu0 0
        %1591 = vmatpush1.bf16.xpose.msra.mxu0 0
        %1592 = vmatprep.subr.bf16.mxu0 0
        %1593 = vmatpush1.bf16.xpose.msra.mxu0 0
        %1594 = vmatprep.mubr.bf16.mxu0 0
        %1595 = vmatmul.mubr.bf16.gmra.mrb[0].mxu0 %v1557
        %v1596 = vpop.f32.mrb[0].mxu0
        %v1597 = vadd.f32 0.0, %v1596
        %v1598 = vpop.f32.mrb[0].mxu0
        %v1599 = vpop.f32.mrb[0].mxu0
        %v1600 = vpop.f32.mrb[0].mxu0
        %1601 = vdwg.mxu0
        %v1602 = vmul.f32 %v1547, 0.35355338
        %v1603 = vmul.f32 %v1597, 0.35355338
        %v1604 = vsel %vm839, %v1602, -inf
        %1605 = vmax.xlane.f32.xlu0 %v1604
        %v1606 = vpop.xlane.xlu0 %1605
        %v1607 = vsel %vm839, %v1603, -inf
        %1608 = vmax.xlane.f32.xlu0 %v1607
        %v1609 = vpop.xlane.xlu0 %1608
        %v1610 = vsub.f32 %v1602, %v1606
        %v1611 = vsub.f32 %v1603, %v1609
        %v1612 = vmul.f32 %v1610, 1.442695
        %v1613 = vpow.pop %v1612
        %v1614 = vmul.f32 %v1611, 1.442695
        %v1615 = vpow.pop %v1614
        %v1616 = vsel %vm839, %v1613, 0.0
        %1617 = vadd.xlane.f32.xlu0 %v1616
        %v1618 = vpop.xlane.xlu0 %1617
        %v1619 = vsel %vm839, %v1615, 0.0
        %1620 = vadd.xlane.f32.xlu0 %v1619
        %v1621 = vpop.xlane.xlu0 %1620
        %v1622 = vrcp.pop %v1618
        %v1623 = vrcp.pop %v1621
        %v1624 = vmul.f32 %v1613, %v1622
        %v1625 = vmul.f32 %v1615, %v1623
        %v1626 = vpack.c.bf16 %v1624, %v1624
        %v1627 = vpack.c.bf16 %v1625, %v1625
        %1628 = vrot.lane.b32.xlu0 %v834, 40
        %v1629 = vpop.permute.xlu0 %1628
        %v1631 = vsel %vm839, %v1626, 0
        %v1634 = vsel %vm966, %v1629, 0
        %1636 = vmatprep.subr.bf16.mxu0 0
        %1637 = vmatpush1.bf16.msra.mxu0 %v1634
        %1638 = vmatprep.subr.bf16.mxu0 0
        %1639 = vmatpush1.bf16.msra.mxu0 0
        %1640 = vmatprep.subr.bf16.mxu0 0
        %1641 = vmatpush1.bf16.msra.mxu0 0
        %1642 = vmatprep.subr.bf16.mxu0 0
        %1643 = vmatpush1.bf16.msra.mxu0 0
        %1644 = vmatprep.subr.bf16.mxu0 0
        %1645 = vmatpush1.bf16.msra.mxu0 0
        %1646 = vmatprep.subr.bf16.mxu0 0
        %1647 = vmatpush1.bf16.msra.mxu0 0
        %1648 = vmatprep.subr.bf16.mxu0 0
        %1649 = vmatpush1.bf16.msra.mxu0 0
        %1650 = vmatprep.subr.bf16.mxu0 0
        %1651 = vmatpush1.bf16.msra.mxu0 0
        %1652 = vmatprep.subr.bf16.mxu0 0
        %1653 = vmatpush1.bf16.msra.mxu0 0
        %1654 = vmatprep.subr.bf16.mxu0 0
        %1655 = vmatpush1.bf16.msra.mxu0 0
        %1656 = vmatprep.subr.bf16.mxu0 0
        %1657 = vmatpush1.bf16.msra.mxu0 0
        %1658 = vmatprep.subr.bf16.mxu0 0
        %1659 = vmatpush1.bf16.msra.mxu0 0
        %1660 = vmatprep.subr.bf16.mxu0 0
        %1661 = vmatpush1.bf16.msra.mxu0 0
        %1662 = vmatprep.subr.bf16.mxu0 0
        %1663 = vmatpush1.bf16.msra.mxu0 0
        %1664 = vmatprep.subr.bf16.mxu0 0
        %1665 = vmatpush1.bf16.msra.mxu0 0
        %1666 = vmatprep.subr.bf16.mxu0 0
        %1667 = vmatpush1.bf16.msra.mxu0 0
        %1668 = vmatprep.mubr.bf16.mxu0 0
        %1669 = vmatmul.mubr.bf16.gmra.mrb[0].mxu0 %v1631
        %v1670 = vpop.f32.mrb[0].mxu0
        %v1671 = vadd.f32 0.0, %v1670
        %v1672 = vpop.f32.mrb[0].mxu0
        %v1673 = vpop.f32.mrb[0].mxu0
        %v1674 = vpop.f32.mrb[0].mxu0
        %1675 = vdwg.mxu0
        %1676 = vrot.lane.b32.xlu0 %v835, 40
        %v1677 = vpop.permute.xlu0 %1676
        %v1679 = vsel %vm839, %v1627, 0
        %v1682 = vsel %vm966, %v1677, 0
        %1684 = vmatprep.subr.bf16.mxu0 0
        %1685 = vmatpush1.bf16.msra.mxu0 %v1682
        %1686 = vmatprep.subr.bf16.mxu0 0
        %1687 = vmatpush1.bf16.msra.mxu0 0
        %1688 = vmatprep.subr.bf16.mxu0 0
        %1689 = vmatpush1.bf16.msra.mxu0 0
        %1690 = vmatprep.subr.bf16.mxu0 0
        %1691 = vmatpush1.bf16.msra.mxu0 0
        %1692 = vmatprep.subr.bf16.mxu0 0
        %1693 = vmatpush1.bf16.msra.mxu0 0
        %1694 = vmatprep.subr.bf16.mxu0 0
        %1695 = vmatpush1.bf16.msra.mxu0 0
        %1696 = vmatprep.subr.bf16.mxu0 0
        %1697 = vmatpush1.bf16.msra.mxu0 0
        %1698 = vmatprep.subr.bf16.mxu0 0
        %1699 = vmatpush1.bf16.msra.mxu0 0
        %1700 = vmatprep.subr.bf16.mxu0 0
        %1701 = vmatpush1.bf16.msra.mxu0 0
        %1702 = vmatprep.subr.bf16.mxu0 0
        %1703 = vmatpush1.bf16.msra.mxu0 0
        %1704 = vmatprep.subr.bf16.mxu0 0
        %1705 = vmatpush1.bf16.msra.mxu0 0
        %1706 = vmatprep.subr.bf16.mxu0 0
        %1707 = vmatpush1.bf16.msra.mxu0 0
        %1708 = vmatprep.subr.bf16.mxu0 0
        %1709 = vmatpush1.bf16.msra.mxu0 0
        %1710 = vmatprep.subr.bf16.mxu0 0
        %1711 = vmatpush1.bf16.msra.mxu0 0
        %1712 = vmatprep.subr.bf16.mxu0 0
        %1713 = vmatpush1.bf16.msra.mxu0 0
        %1714 = vmatprep.subr.bf16.mxu0 0
        %1715 = vmatpush1.bf16.msra.mxu0 0
        %1716 = vmatprep.mubr.bf16.mxu0 0
        %1717 = vmatmul.mubr.bf16.gmra.mrb[0].mxu0 %v1679
        %v1718 = vpop.f32.mrb[0].mxu0
        %v1719 = vadd.f32 0.0, %v1718
        %v1720 = vpop.f32.mrb[0].mxu0
        %v1721 = vpop.f32.mrb[0].mxu0
        %v1722 = vpop.f32.mrb[0].mxu0
        %1723 = vdwg.mxu0
        %1726 = vrot.lane.b32.xlu0 %v1227, 8
        %v1727 = vpop.permute.xlu0 %1726
        %1728 = vrot.lane.b32.xlu0 %v1275, 8
        %v1729 = vpop.permute.xlu0 %1728
        %1734 = vrot.lane.b32.xlu0 %v1449, 16
        %v1735 = vpop.permute.xlu0 %1734
        %1736 = vrot.lane.b32.xlu0 %v1497, 16
        %v1737 = vpop.permute.xlu0 %1736
        %1742 = vrot.lane.b32.xlu0 %v1671, 24
        %v1743 = vpop.permute.xlu0 %1742
        %1744 = vrot.lane.b32.xlu0 %v1719, 24
        %v1745 = vpop.permute.xlu0 %1744
        %v1748 = vsel %vm839, %v1005, %v1727
        %v1749 = vsel %vm839, %v1053, %v1729
        %vm1750 = vcmask 130048
        %v1751 = vsel %vm1750, %v1748, %v1735
        %v1752 = vsel %vm1750, %v1749, %v1737
        %vm1753 = vcmask 195584
        %v1754 = vsel %vm1753, %v1751, %v1743
        %v1755 = vsel %vm1753, %v1752, %v1745
        %v1756 = vpack.c.bf16 %v1755, %v1754
        %v1757 = vld [vmem:[%s675] sm:$0xf]
        %v1758 = vld [vmem:[%s675 + $0x4] sm:$0xf]
        %v1759 = vld [vmem:[%s675 + $0x8] sm:$0xf]
        %v1760 = vld [vmem:[%s675 + $0xc] sm:$0xf]
        %v1761 = vld [vmem:[%s678] sm:$0x1]
        %v1763 = vlaneseq
        %v1764 = vshrl.u32 %v1763, 7
        %v1765 = vsub.s32 0, %v1764
        %v1766 = vrot.slane %v1761, %v1765
        %v1772 = vunpack.c.l.b16 %v1757
        %v1773 = vunpack.c.l.b16 %v1758
        %v1774 = vunpack.c.l.b16 %v1759
        %v1775 = vunpack.c.l.b16 %v1760
        %v1776 = vpack.c.b16 %v1773, %v1772
        %v1777 = vpack.c.b16 %v1775, %v1774
        %v1781 = vsel %vm729, %v1756, 0
        %1783 = vmatprep.subr.bf16.mxu0 0
        %1784 = vmatpush1.bf16.msra.mxu0 %v1776
        %1785 = vmatprep.subr.bf16.mxu0 0
        %1786 = vmatpush1.bf16.msra.mxu0 %v1777
        %1787 = vmatprep.subr.bf16.mxu0 0
        %1788 = vmatpush1.bf16.msra.mxu0 0
        %1789 = vmatprep.subr.bf16.mxu0 0
        %1790 = vmatpush1.bf16.msra.mxu0 0
        %1791 = vmatprep.subr.bf16.mxu0 0
        %1792 = vmatpush1.bf16.msra.mxu0 0
        %1793 = vmatprep.subr.bf16.mxu0 0
        %1794 = vmatpush1.bf16.msra.mxu0 0
        %1795 = vmatprep.subr.bf16.mxu0 0
        %1796 = vmatpush1.bf16.msra.mxu0 0
        %1797 = vmatprep.subr.bf16.mxu0 0
        %1798 = vmatpush1.bf16.msra.mxu0 0
        %1799 = vmatprep.subr.bf16.mxu0 0
        %1800 = vmatpush1.bf16.msra.mxu0 0
        %1801 = vmatprep.subr.bf16.mxu0 0
        %1802 = vmatpush1.bf16.msra.mxu0 0
        %1803 = vmatprep.subr.bf16.mxu0 0
        %1804 = vmatpush1.bf16.msra.mxu0 0
        %1805 = vmatprep.subr.bf16.mxu0 0
        %1806 = vmatpush1.bf16.msra.mxu0 0
        %1807 = vmatprep.subr.bf16.mxu0 0
        %1808 = vmatpush1.bf16.msra.mxu0 0
        %1809 = vmatprep.subr.bf16.mxu0 0
        %1810 = vmatpush1.bf16.msra.mxu0 0
        %1811 = vmatprep.subr.bf16.mxu0 0
        %1812 = vmatpush1.bf16.msra.mxu0 0
        %1813 = vmatprep.subr.bf16.mxu0 0
        %1814 = vmatpush1.bf16.msra.mxu0 0
        %1815 = vmatprep.mubr.bf16.mxu0 0
        %1816 = vmatmul.mubr.bf16.gmra.mrb[0].mxu0 %v1781
        %v1817 = vpop.f32.mrb[0].mxu0
        %v1818 = vadd.f32 %v1766, %v1817
        %v1819 = vpop.f32.mrb[0].mxu0
        %v1820 = vpop.f32.mrb[0].mxu0
        %v1821 = vadd.f32 %v1766, %v1820
        %v1822 = vpop.f32.mrb[0].mxu0
        %1823 = vdwg.mxu0
        %v1824 = vadd.f32 %v1818, %v725
        %v1825 = vadd.f32 %v1821, %v726
        %v1826 = vld [vmem:[%s681] sm:$0x1]
        %v1827 = vld [vmem:[%s573] sm:$0x1]
        %v1828 = vsel %vm729, %v1824, 0.0
        %1829 = vadd.xlane.f32.xlu0 %v1828
        %v1830 = vpop.xlane.xlu0 %1829
        %v1831 = vsel %vm729, %v1825, 0.0
        %1832 = vadd.xlane.f32.xlu0 %v1831
        %v1833 = vpop.xlane.xlu0 %1832
        %v1834 = vmul.f32 %v1830, %v736
        %v1835 = vmul.f32 %v1833, %v736
        %v1836 = vsub.f32 %v1824, %v1834
        %v1837 = vsub.f32 %v1825, %v1835
        %v1838 = vmul.f32 %v1836, %v1836
        %v1839 = vmul.f32 %v1837, %v1837
        %v1840 = vsel %vm729, %v1838, 0.0
        %1841 = vadd.xlane.f32.xlu0 %v1840
        %v1842 = vpop.xlane.xlu0 %1841
        %v1843 = vsel %vm729, %v1839, 0.0
        %1844 = vadd.xlane.f32.xlu0 %v1843
        %v1845 = vpop.xlane.xlu0 %1844
        %v1846 = vmul.f32 %v1842, %v736
        %v1847 = vmul.f32 %v1845, %v736
        %v1848 = vadd.f32 %v1846, 1e-05
        %v1849 = vadd.f32 %v1847, 1e-05
        %v1850 = vrsqrt.pop %v1848
        %v1851 = vrsqrt.pop %v1849
        %v1852 = vmul.f32 %v1836, %v1850
        %v1853 = vmul.f32 %v1837, %v1851
        %v1855 = vlaneseq
        %v1856 = vshrl.u32 %v1855, 7
        %v1857 = vsub.s32 0, %v1856
        %v1858 = vrot.slane %v1826, %v1857
        %v1860 = vmul.f32 %v1852, %v1858
        %v1861 = vmul.f32 %v1853, %v1858
        %v1863 = vlaneseq
        %v1864 = vshrl.u32 %v1863, 7
        %v1865 = vsub.s32 0, %v1864
        %v1866 = vrot.slane %v1827, %v1865
        %v1868 = vadd.f32 %v1860, %v1866
        %v1869 = vadd.f32 %v1861, %v1866
        %v1870 = vpack.c.bf16 %v1869, %v1868
        %v1871 = vld [vmem:[%s686] sm:$0xf]
        %v1872 = vld [vmem:[%s686 + $0x4] sm:$0xf]
        %v1873 = vld [vmem:[%s686 + $0x8] sm:$0xf]
        %v1874 = vld [vmem:[%s686 + $0xc] sm:$0xf]
        %v1875 = vld [vmem:[%s581] sm:$0x1]
        %v1877 = vlaneseq
        %v1878 = vshrl.u32 %v1877, 7
        %v1879 = vsub.s32 0, %v1878
        %v1880 = vrot.slane %v1875, %v1879
        %v1886 = vunpack.c.l.b16 %v1871
        %v1887 = vunpack.c.l.b16 %v1872
        %v1888 = vunpack.c.l.b16 %v1873
        %v1889 = vunpack.c.l.b16 %v1874
        %v1890 = vpack.c.b16 %v1887, %v1886
        %v1891 = vpack.c.b16 %v1889, %v1888
        %v1895 = vsel %vm729, %v1870, 0
        %1897 = vmatprep.subr.bf16.mxu0 0
        %1898 = vmatpush1.bf16.msra.mxu0 %v1890
        %1899 = vmatprep.subr.bf16.mxu0 0
        %1900 = vmatpush1.bf16.msra.mxu0 %v1891
        %1901 = vmatprep.subr.bf16.mxu0 0
        %1902 = vmatpush1.bf16.msra.mxu0 0
        %1903 = vmatprep.subr.bf16.mxu0 0
        %1904 = vmatpush1.bf16.msra.mxu0 0
        %1905 = vmatprep.subr.bf16.mxu0 0
        %1906 = vmatpush1.bf16.msra.mxu0 0
        %1907 = vmatprep.subr.bf16.mxu0 0
        %1908 = vmatpush1.bf16.msra.mxu0 0
        %1909 = vmatprep.subr.bf16.mxu0 0
        %1910 = vmatpush1.bf16.msra.mxu0 0
        %1911 = vmatprep.subr.bf16.mxu0 0
        %1912 = vmatpush1.bf16.msra.mxu0 0
        %1913 = vmatprep.subr.bf16.mxu0 0
        %1914 = vmatpush1.bf16.msra.mxu0 0
        %1915 = vmatprep.subr.bf16.mxu0 0
        %1916 = vmatpush1.bf16.msra.mxu0 0
        %1917 = vmatprep.subr.bf16.mxu0 0
        %1918 = vmatpush1.bf16.msra.mxu0 0
        %1919 = vmatprep.subr.bf16.mxu0 0
        %1920 = vmatpush1.bf16.msra.mxu0 0
        %1921 = vmatprep.subr.bf16.mxu0 0
        %1922 = vmatpush1.bf16.msra.mxu0 0
        %1923 = vmatprep.subr.bf16.mxu0 0
        %1924 = vmatpush1.bf16.msra.mxu0 0
        %1925 = vmatprep.subr.bf16.mxu0 0
        %1926 = vmatpush1.bf16.msra.mxu0 0
        %1927 = vmatprep.subr.bf16.mxu0 0
        %1928 = vmatpush1.bf16.msra.mxu0 0
        %1929 = vmatprep.mubr.bf16.mxu0 0
        %1930 = vmatmul.mubr.bf16.gmra.mrb[0].mxu0 %v1895
        %v1931 = vpop.f32.mrb[0].mxu0
        %v1932 = vadd.f32 %v1880, %v1931
        %v1933 = vpop.f32.mrb[0].mxu0
        %v1934 = vpop.f32.mrb[0].mxu0
        %v1935 = vadd.f32 %v1880, %v1934
        %v1936 = vpop.f32.mrb[0].mxu0
        %1937 = vdwg.mxu0
        %v1938 = vmul.f32 %v1932, 0.5
        %v1939 = vmul.f32 %v1935, 0.5
        %v1940 = vmul.f32 %v1932, 0.70710677
        %v1941 = vmul.f32 %v1935, 0.70710677
        %v1942 = verf.f32.pop %v1940
        %v1943 = verf.f32.pop %v1941
        %v1944 = vadd.f32 %v1942, 1.0
        %v1945 = vadd.f32 %v1943, 1.0
        %v1946 = vmul.f32 %v1938, %v1944
        %v1947 = vmul.f32 %v1939, %v1945
        %v1948 = vpack.c.bf16 %v1947, %v1946
        %v1949 = vld [vmem:[%s691] sm:$0xf]
        %v1950 = vld [vmem:[%s691 + $0x4] sm:$0xf]
        %v1951 = vld [vmem:[%s691 + $0x8] sm:$0xf]
        %v1952 = vld [vmem:[%s691 + $0xc] sm:$0xf]
        %v1953 = vld [vmem:[%s691 + $0x10] sm:$0xf]
        %v1954 = vld [vmem:[%s691 + $0x14] sm:$0xf]
        %v1955 = vld [vmem:[%s691 + $0x18] sm:$0xf]
        %v1956 = vld [vmem:[%s691 + $0x1c] sm:$0xf]
        %v1957 = vld [vmem:[%s694] sm:$0x1]
        %v1959 = vlaneseq
        %v1960 = vshrl.u32 %v1959, 7
        %v1961 = vsub.s32 0, %v1960
        %v1962 = vrot.slane %v1957, %v1961
        %v1972 = vunpack.c.l.b16 %v1949
        %v1973 = vunpack.c.l.b16 %v1950
        %v1974 = vunpack.c.l.b16 %v1951
        %v1975 = vunpack.c.l.b16 %v1952
        %v1976 = vunpack.c.l.b16 %v1953
        %v1977 = vunpack.c.l.b16 %v1954
        %v1978 = vunpack.c.l.b16 %v1955
        %v1979 = vunpack.c.l.b16 %v1956
        %v1980 = vpack.c.b16 %v1973, %v1972
        %v1981 = vpack.c.b16 %v1975, %v1974
        %v1982 = vpack.c.b16 %v1977, %v1976
        %v1983 = vpack.c.b16 %v1979, %v1978
        %vm1988 = vcmask 523264
        %v1990 = vsel %vm1988, %v1948, 0
        %1992 = vmatprep.subr.bf16.mxu0 0
        %1993 = vmatpush1.bf16.msra.mxu0 %v1980
        %1994 = vmatprep.subr.bf16.mxu0 0
        %1995 = vmatpush1.bf16.msra.mxu0 %v1981
        %1996 = vmatprep.subr.bf16.mxu0 0
        %1997 = vmatpush1.bf16.msra.mxu0 %v1982
        %1998 = vmatprep.subr.bf16.mxu0 0
        %1999 = vmatpush1.bf16.msra.mxu0 %v1983
        %2000 = vmatprep.subr.bf16.mxu0 0
        %2001 = vmatpush1.bf16.msra.mxu0 0
        %2002 = vmatprep.subr.bf16.mxu0 0
        %2003 = vmatpush1.bf16.msra.mxu0 0
        %2004 = vmatprep.subr.bf16.mxu0 0
        %2005 = vmatpush1.bf16.msra.mxu0 0
        %2006 = vmatprep.subr.bf16.mxu0 0
        %2007 = vmatpush1.bf16.msra.mxu0 0
        %2008 = vmatprep.subr.bf16.mxu0 0
        %2009 = vmatpush1.bf16.msra.mxu0 0
        %2010 = vmatprep.subr.bf16.mxu0 0
        %2011 = vmatpush1.bf16.msra.mxu0 0
        %2012 = vmatprep.subr.bf16.mxu0 0
        %2013 = vmatpush1.bf16.msra.mxu0 0
        %2014 = vmatprep.subr.bf16.mxu0 0
        %2015 = vmatpush1.bf16.msra.mxu0 0
        %2016 = vmatprep.subr.bf16.mxu0 0
        %2017 = vmatpush1.bf16.msra.mxu0 0
        %2018 = vmatprep.subr.bf16.mxu0 0
        %2019 = vmatpush1.bf16.msra.mxu0 0
        %2020 = vmatprep.subr.bf16.mxu0 0
        %2021 = vmatpush1.bf16.msra.mxu0 0
        %2022 = vmatprep.subr.bf16.mxu0 0
        %2023 = vmatpush1.bf16.msra.mxu0 0
        %2024 = vmatprep.mubr.bf16.mxu0 0
        %2025 = vmatmul.mubr.bf16.gmra.mrb[0].mxu0 %v1990
        %v2026 = vpop.f32.mrb[0].mxu0
        %v2027 = vadd.f32 %v1962, %v2026
        %v2028 = vpop.f32.mrb[0].mxu0
        %v2029 = vpop.f32.mrb[0].mxu0
        %v2030 = vadd.f32 %v1962, %v2029
        %v2031 = vpop.f32.mrb[0].mxu0
        %2032 = vdwg.mxu0
        %v2033 = vadd.f32 %v2027, %v1824
        %v2034 = vadd.f32 %v2030, %v1825
        %2035 = vst.msk [vmem:[#allocation2] sm:$0xff] %vm729, %v2033
        %2036 = vst.msk [vmem:[#allocation2 + $0x8] sm:$0xff] %vm729, %v2034
        %p2037 = scmp.eq.s32.totalorder %s40, 1
        // Predicated region
        $region97: #{tpu_custom_call.1} parent=75 // pred_check
          %p2038 = pneg %p2037
        $region98: #{tpu_custom_call.1} parent=75 // pred_check_branch
          %2040 = sbr.rel (%p2038) target = $region100
        $region99: #{tpu_custom_call.1} parent=75 // pred_region
          %v2041 = vld [vmem:[%s13] sm:$0x1]
          %v2042 = vld [vmem:[%s14] sm:$0x1]
          %v2043 = vsel %vm729, %v2033, 0.0
          %2044 = vadd.xlane.f32.xlu0 %v2043
          %v2045 = vpop.xlane.xlu0 %2044
          %v2046 = vsel %vm729, %v2034, 0.0
          %2047 = vadd.xlane.f32.xlu0 %v2046
          %v2048 = vpop.xlane.xlu0 %2047
          %v2049 = vmul.f32 %v2045, %v736
          %v2050 = vmul.f32 %v2048, %v736
          %v2051 = vsub.f32 %v2033, %v2049
          %v2052 = vsub.f32 %v2034, %v2050
          %v2053 = vmul.f32 %v2051, %v2051
          %v2054 = vmul.f32 %v2052, %v2052
          %v2055 = vsel %vm729, %v2053, 0.0
          %2056 = vadd.xlane.f32.xlu0 %v2055
          %v2057 = vpop.xlane.xlu0 %2056
          %v2058 = vsel %vm729, %v2054, 0.0
          %2059 = vadd.xlane.f32.xlu0 %v2058
          %v2060 = vpop.xlane.xlu0 %2059
          %v2061 = vmul.f32 %v2057, %v736
          %v2062 = vmul.f32 %v2060, %v736
          %v2063 = vadd.f32 %v2061, 1e-05
          %v2064 = vadd.f32 %v2062, 1e-05
          %v2065 = vrsqrt.pop %v2063
          %v2066 = vrsqrt.pop %v2064
          %v2067 = vmul.f32 %v2051, %v2065
          %v2068 = vmul.f32 %v2052, %v2066
          %v2070 = vlaneseq
          %v2071 = vshrl.u32 %v2070, 7
          %v2072 = vsub.s32 0, %v2071
          %v2073 = vrot.slane %v2041, %v2072
          %v2075 = vmul.f32 %v2067, %v2073
          %v2076 = vmul.f32 %v2068, %v2073
          %v2078 = vlaneseq
          %v2079 = vshrl.u32 %v2078, 7
          %v2080 = vsub.s32 0, %v2079
          %v2081 = vrot.slane %v2042, %v2080
          %v2083 = vadd.f32 %v2075, %v2081
          %v2084 = vadd.f32 %v2076, %v2081
          %2085 = vst.msk [vmem:[#allocation11] sm:$0xff] %vm729, %v2083
          %2086 = vst.msk [vmem:[#allocation11 + $0x8] sm:$0xff] %vm729, %v2084
        $region100: #{tpu_custom_call.1} parent=75 // pred_fallthru
          _
        // Predicated region
        $region101: #{tpu_custom_call.1} parent=75 // pred_check
          %p2087 = pneg %p419
        $region102: #{tpu_custom_call.1} parent=75 // pred_check_branch
          %2089 = sbr.rel (%p2087) target = $region104
        $region103: #{tpu_custom_call.1} parent=75 // pred_region
          %s2090 = smul.u32 2, %s39
          %s2092 = ssub.s32 256, 256
          %2093 = vsyncadd [#allocation7], %s2092
          %s2094 = smul.addr %s2090, 128
          %s2095 = scalar_lea.hbm %s15, %s2094
          %s2096 = sshll.u32 [#allocation11], 4
          %s2097 = int_to_ptr.vmem [resolvable:$true] %s2096
          %2102 = dma.vmem_to_hbm [thread:$0]  %s2097, 256, %s2095, [#allocation7], 128, 128, 8
        $region104: #{tpu_custom_call.1} parent=75 // pred_fallthru
          _
        // Predicated region
        $region105: #{tpu_custom_call.1} parent=75 // pred_check
          %p2103 = pneg %p419
        $region106: #{tpu_custom_call.1} parent=75 // pred_check_branch
          %2105 = sbr.rel (%p2103) target = $region108
        $region107: #{tpu_custom_call.1} parent=75 // pred_region
          %2106 = dma.done [#allocation7], 256
        $region108: #{tpu_custom_call.1} parent=75 // pred_fallthru
          _
      $region76: #{tpu_custom_call.1} parent=5 // pred_fallthru
        _
      %p2107 = scmp.le.s32.totalorder 2, %s30
      // Predicated region
      $region109: #{tpu_custom_call.1} parent=5 // pred_check
        %p2108 = pneg %p2107
      $region110: #{tpu_custom_call.1} parent=5 // pred_check_branch
        %2110 = sbr.rel (%p2108) target = $region112
      $region111: #{tpu_custom_call.1} parent=5 // pred_region
        %s2111 = ssub.s32 %s30, 2
      $region112: #{tpu_custom_call.1} parent=5 // pred_fallthru
        _
    $region6: #{tpu_custom_call.1} parent=1 // loop_footer
      %s34 = sadd.s32 1, %s30
    $region7: #{tpu_custom_call.1} parent=1 // loop_footer_branch
      %29 = sbr.rel target = $region3
    $region8: #{tpu_custom_call.1} parent=1 // loop_exit
      _
    %2112 = vsyncpa [#allocation6], 1
    %s2113 = scalar_lea.sflag [#allocation6], 1
    %2114 = vsyncpa %s2113, 1
    %2115 = vsyncpa [#allocation9], 1
    %s2116 = scalar_lea.sflag [#allocation9], 1
    %2117 = vsyncpa %s2116, 1
    %2118 = vsyncpa [#allocation7], 1
    %s2119 = scalar_lea.sflag [#allocation7], 1
    %2120 = vsyncpa %s2119, 1

</llo_original>
